<compile_context>
chip_gen: v7x
topology: tpu7x:2x2x1
jax: 0.10.0
libtpu: 0.0.40
codegen_flags: <defaults>
</compile_context>

<pallas_src>
import functools
import math

import jax
import jax.numpy as jnp
from jax.experimental import pallas as pl
from jax.experimental.pallas import tpu as pltpu

_SQRT1_2 = 1.0 / math.sqrt(2.0)
_MXU_TILE = 512                       # default GEMM tile (clamped to dims)
_ATTN_TILE = 256                      # default q/kv tile for attention


@functools.lru_cache(maxsize=None)
def _vmem_limit_bytes():
    # Per-generation VMEM budget: ~3/4 of physical (v7x: 64 MiB -> 48 MiB,
    # v5e/v6e: 128 MiB -> 96 MiB).  Falls back to a v7x-safe 48 MiB.
    try:
        cap = getattr(pltpu.get_tpu_info(), "vmem_capacity_bytes", None)
        if cap:
            return int(cap * 3 // 4)
    except Exception:
        pass
    return 48 * 1024 * 1024


def _pad_dim(a, axis, mult):
    rem = (-a.shape[axis]) % mult
    if rem == 0:
        return a
    pad = [(0, 0)] * a.ndim
    pad[axis] = (0, rem)
    return jnp.pad(a, pad)


# ---------------------------------------------------------------------------
# Kernel 1: tiled matmul + bias (+ optional exact-erf GELU on the last K step)
# ---------------------------------------------------------------------------
def _matmul_bias_kernel(x_ref, w_ref, b_ref, o_ref, acc_ref, *, activation):
    k = pl.program_id(2)

    @pl.when(k == 0)
    def _():
        acc_ref[...] = jnp.zeros_like(acc_ref)

    acc_ref[...] += jnp.dot(x_ref[...], w_ref[...],
                            preferred_element_type=jnp.float32)

    @pl.when(k == pl.num_programs(2) - 1)
    def _():
        y = acc_ref[...] + b_ref[...].astype(jnp.float32)
        if activation == "gelu":
            # exact erf-based GELU (torch F.gelu default)
            y = 0.5 * y * (1.0 + jax.lax.erf(y * _SQRT1_2))
        o_ref[...] = y.astype(o_ref.dtype)


def matmul_bias(x, w, b, activation=None, out_dtype=jnp.float32,
                tm=_MXU_TILE, tn=_MXU_TILE, tk=_MXU_TILE):
    """x: (M, K) bf16, w: (K, N) bf16, b: (N,) f32 -> (M, N) out_dtype."""
    M, K = x.shape
    K2, N = w.shape
    assert K == K2
    tm = M if M <= tm else tm
    tn = N if N <= tn else tn
    tk = K if K <= tk else tk

    # TODO(synk): for ragged N (e.g. real vocab sizes) pad weights once at init
    # and handle the ragged last N tile with a masked epilogue instead of
    # padding/slicing the logits each step.
    xp = _pad_dim(_pad_dim(x, 0, tm), 1, tk)
    wp = _pad_dim(_pad_dim(w, 0, tk), 1, tn)
    bp = _pad_dim(b.reshape(1, N), 1, tn)
    Mp, Kp = xp.shape
    Np = wp.shape[1]

    out = pl.pallas_call(
        functools.partial(_matmul_bias_kernel, activation=activation),
        grid=(Mp // tm, Np // tn, Kp // tk),
        in_specs=[
            pl.BlockSpec((tm, tk), lambda i, j, k: (i, k)),
            pl.BlockSpec((tk, tn), lambda i, j, k: (k, j)),
            pl.BlockSpec((1, tn), lambda i, j, k: (0, j)),
        ],
        out_specs=pl.BlockSpec((tm, tn), lambda i, j, k: (i, j)),
        out_shape=jax.ShapeDtypeStruct((Mp, Np), out_dtype),
        scratch_shapes=[pltpu.VMEM((tm, tn), jnp.float32)],
        compiler_params=pltpu.CompilerParams(
            dimension_semantics=("parallel", "parallel", "arbitrary"),
            vmem_limit_bytes=_vmem_limit_bytes()),
    )(xp, wp, bp)
    if (Mp, Np) != (M, N):
        out = out[:M, :N]
    return out


# ---------------------------------------------------------------------------
# Kernel 2: fused tiled matmul + bias + residual add + LayerNorm epilogue
# ---------------------------------------------------------------------------
def _matmul_res_ln_kernel(x_ref, w_ref, b_ref, res_ref, g_ref, beta_ref,
                          o_ref, acc_ref):
    k = pl.program_id(1)

    @pl.when(k == 0)
    def _():
        acc_ref[...] = jnp.zeros_like(acc_ref)

    acc_ref[...] += jnp.dot(x_ref[...], w_ref[...],
                            preferred_element_type=jnp.float32)

    @pl.when(k == pl.num_programs(1) - 1)
    def _():
        y = (acc_ref[...] + b_ref[...].astype(jnp.float32)
             + res_ref[...].astype(jnp.float32))
        mu = jnp.mean(y, axis=-1, keepdims=True)
        var = jnp.mean(jnp.square(y - mu), axis=-1, keepdims=True)
        y = (y - mu) * jax.lax.rsqrt(var + 1e-5)
        y = y * g_ref[...].astype(jnp.float32) + beta_ref[...].astype(jnp.float32)
        o_ref[...] = y.astype(o_ref.dtype)


def matmul_bias_residual_layernorm(x, w, b, res, gamma, beta,
                                   out_dtype=jnp.bfloat16,
                                   tm=_MXU_TILE, tk=_MXU_TILE):
    """LayerNorm(x @ w + b + res) over the last dim. x:(M,K), w:(K,D), res:(M,D)."""
    M, K = x.shape
    K2, D = w.shape
    assert K == K2 and res.shape == (M, D)
    tm = M if M <= tm else tm
    tk = K if K <= tk else tk

    xp = _pad_dim(_pad_dim(x, 0, tm), 1, tk)
    wp = _pad_dim(w, 0, tk)
    resp = _pad_dim(res, 0, tm)
    Mp, Kp = xp.shape

    out = pl.pallas_call(
        _matmul_res_ln_kernel,
        grid=(Mp // tm, Kp // tk),
        in_specs=[
            pl.BlockSpec((tm, tk), lambda i, k: (i, k)),
            pl.BlockSpec((tk, D), lambda i, k: (k, 0)),
            pl.BlockSpec((1, D), lambda i, k: (0, 0)),
            pl.BlockSpec((tm, D), lambda i, k: (i, 0)),
            pl.BlockSpec((1, D), lambda i, k: (0, 0)),
            pl.BlockSpec((1, D), lambda i, k: (0, 0)),
        ],
        out_specs=pl.BlockSpec((tm, D), lambda i, k: (i, 0)),
        out_shape=jax.ShapeDtypeStruct((Mp, D), out_dtype),
        scratch_shapes=[pltpu.VMEM((tm, D), jnp.float32)],
        compiler_params=pltpu.CompilerParams(
            dimension_semantics=("parallel", "arbitrary"),
            vmem_limit_bytes=_vmem_limit_bytes()),
    )(xp, wp, b.reshape(1, D), resp, gamma.reshape(1, D), beta.reshape(1, D))
    if Mp != M:
        out = out[:M]
    return out


# ---------------------------------------------------------------------------
# Kernel 3: flash-style causal attention.
#   grid = (B*nhead, S/tq, S/tk), KV innermost; online softmax in f32 scratch;
#   fully-masked (above-diagonal) KV tiles skipped; normalization applied once
#   to the (tq, Dh) accumulator after the PV matmul; scale folded into q.
# ---------------------------------------------------------------------------
def _flash_causal_kernel(q_ref, k_ref, v_ref, o_ref, m_sc, l_sc, acc_sc):
    tq = q_ref.shape[0]
    tk = k_ref.shape[0]
    qi = pl.program_id(1)
    ki = pl.program_id(2)

    @pl.when(ki == 0)
    def _():
        m_sc[...] = jnp.full_like(m_sc, -1e30)
        l_sc[...] = jnp.zeros_like(l_sc)
        acc_sc[...] = jnp.zeros_like(acc_sc)

    q_start = qi * tq
    k_start = ki * tk

    # Skip KV tiles that lie entirely above the causal diagonal.
    @pl.when(k_start <= q_start + (tq - 1))
    def _():
        # scores without materializing k.T: contract over Dh on both operands
        s = jax.lax.dot_general(q_ref[...], k_ref[...],
                                (((1,), (1,)), ((), ())),
                                preferred_element_type=jnp.float32)  # (tq, tk)
        row = q_start + jax.lax.broadcasted_iota(jnp.int32, (tq, tk), 0)
        col = k_start + jax.lax.broadcasted_iota(jnp.int32, (tq, tk), 1)
        s = jnp.where(col > row, -1e30, s)       # triu(diagonal=1) mask (finite)
        m_prev = m_sc[...]
        m_new = jnp.maximum(m_prev, jnp.max(s, axis=-1, keepdims=True))
        alpha = jnp.exp(m_prev - m_new)
        p = jnp.exp(s - m_new)
        l_sc[...] = alpha * l_sc[...] + jnp.sum(p, axis=-1, keepdims=True)
        acc_sc[...] = alpha * acc_sc[...] + jnp.dot(
            p.astype(v_ref.dtype), v_ref[...], preferred_element_type=jnp.float32)
        m_sc[...] = m_new

    @pl.when(ki == pl.num_programs(2) - 1)
    def _():
        # normalize once on the (tq, Dh) accumulator, not the (tq, tk) probs
        o_ref[...] = (acc_sc[...] * pl.reciprocal(l_sc[...], approx=True)
                      ).astype(o_ref.dtype)


def causal_attention(qkv, *, nhead, block_s=_ATTN_TILE):
    """qkv: (B, S, 3*D) bf16 -> (B, S, D) bf16 (causal multi-head attention)."""
    B, S, threeD = qkv.shape
    D = threeD // 3
    assert D % nhead == 0
    Dh = D // nhead
    scale = 1.0 / math.sqrt(Dh)

    ts = S if S <= block_s else block_s
    Sp = -(-S // ts) * ts

    # head-major layout so the BlockSpec/DMA does the per-head slicing
    x = qkv.reshape(B, S, 3, nhead, Dh)
    x = jnp.transpose(x, (2, 0, 3, 1, 4)).reshape(3, B * nhead, S, Dh)
    q = (x[0].astype(jnp.float32) * scale).astype(jnp.bfloat16)  # fold scale into q
    k = x[1].astype(jnp.bfloat16)
    v = x[2].astype(jnp.bfloat16)
    if Sp != S:
        q = _pad_dim(q, 1, ts)
        k = _pad_dim(k, 1, ts)
        v = _pad_dim(v, 1, ts)

    BH = B * nhead
    out = pl.pallas_call(
        _flash_causal_kernel,
        grid=(BH, Sp // ts, Sp // ts),
        in_specs=[
            pl.BlockSpec((None, ts, Dh), lambda bh, qi, ki: (bh, qi, 0)),
            pl.BlockSpec((None, ts, Dh), lambda bh, qi, ki: (bh, ki, 0)),
            pl.BlockSpec((None, ts, Dh), lambda bh, qi, ki: (bh, ki, 0)),
        ],
        out_specs=pl.BlockSpec((None, ts, Dh), lambda bh, qi, ki: (bh, qi, 0)),
        out_shape=jax.ShapeDtypeStruct((BH, Sp, Dh), jnp.bfloat16),
        scratch_shapes=[pltpu.VMEM((ts, 1), jnp.float32),    # running max m
                        pltpu.VMEM((ts, 1), jnp.float32),    # running sum l
                        pltpu.VMEM((ts, Dh), jnp.float32)],  # un-normalized acc
        compiler_params=pltpu.CompilerParams(
            dimension_semantics=("parallel", "parallel", "arbitrary"),
            vmem_limit_bytes=_vmem_limit_bytes()),
    )(q, k, v)

    if Sp != S:
        out = out[:, :S]
    out = out.reshape(B, nhead, S, Dh)
    return jnp.transpose(out, (0, 2, 1, 3)).reshape(B, S, D)


# ---------------------------------------------------------------------------
# Parameter construction (deterministic, in-script)
# ---------------------------------------------------------------------------
def positional_encoding(max_len, d_model):
    pos = jnp.arange(max_len, dtype=jnp.float32)[:, None]
    div = jnp.exp(jnp.arange(0, d_model, 2, dtype=jnp.float32)
                  * (-math.log(10000.0) / d_model))
    pe = jnp.zeros((max_len, d_model), jnp.float32)
    pe = pe.at[:, 0::2].set(jnp.sin(pos * div))
    pe = pe.at[:, 1::2].set(jnp.cos(pos * div))
    return pe


def init_params(key, vocab, d_model, num_layers, dff, max_seq_len):
    keys = jax.random.split(key, 2 + num_layers)
    bf16 = jnp.bfloat16
    params = {
        # nn.Embedding weight ~ N(0, d_model^-0.5) (kept f32 for the gather)
        "embed": jax.random.normal(keys[0], (vocab, d_model), jnp.float32)
                 * d_model ** -0.5,
        # fc_out: weight ~ N(0, d_model^-0.5), bias = 0; stored transposed (D, V)
        "fc_w": (jax.random.normal(keys[1], (vocab, d_model), jnp.float32)
                 * d_model ** -0.5).T.astype(bf16),
        "fc_b": jnp.zeros((vocab,), jnp.float32),
        "pe": positional_encoding(max_seq_len, d_model),
        "layers": [],
    }
    std = 0.02
    for l in range(num_layers):
        k = jax.random.split(keys[2 + l], 4)
        params["layers"].append(dict(
            w_qkv=(jax.random.normal(k[0], (d_model, 3 * d_model), jnp.float32)
                   * std).astype(bf16),
            b_qkv=jnp.zeros((3 * d_model,), jnp.float32),
            w_o=(jax.random.normal(k[1], (d_model, d_model), jnp.float32)
                 * std).astype(bf16),
            b_o=jnp.zeros((d_model,), jnp.float32),
            w_ff1=(jax.random.normal(k[2], (d_model, dff), jnp.float32)
                   * std).astype(bf16),
            b_ff1=jnp.zeros((dff,), jnp.float32),
            w_ff2=(jax.random.normal(k[3], (dff, d_model), jnp.float32)
                   * std).astype(bf16),
            b_ff2=jnp.zeros((d_model,), jnp.float32),
            ln1_g=jnp.ones((d_model,), jnp.float32),
            ln1_b=jnp.zeros((d_model,), jnp.float32),
            ln2_g=jnp.ones((d_model,), jnp.float32),
            ln2_b=jnp.zeros((d_model,), jnp.float32),
        ))
    return params


# ---------------------------------------------------------------------------
# Forward pass (embedding gather in XLA, everything else in Pallas kernels)
# ---------------------------------------------------------------------------
def forward(params, src, *, nhead):
    B, S = src.shape
    D = params["embed"].shape[1]

    # TODO(synk): token-embedding gather stays as an XLA gather (no clean
    # tiled Pallas equivalent worth it at this size).
    x = params["embed"][src] * math.sqrt(D)            # (B, S, D) f32
    x = x + params["pe"][:S][None, :, :]
    x2 = x.reshape(B * S, D).astype(jnp.bfloat16)      # bf16 activations

    # TODO(synk): dropout (p=0.1) is treated as identity (inference mode).
    for lp in params["layers"]:
        # --- self attention block: QKV GEMM -> flash attention -> fused
        #     out_proj + residual + LayerNorm1 ---
        qkv = matmul_bias(x2, lp["w_qkv"], lp["b_qkv"],
                          out_dtype=jnp.bfloat16)       # (B*S, 3D)
        attn = causal_attention(qkv.reshape(B, S, 3 * D), nhead=nhead)
        attn = attn.reshape(B * S, D)                   # (B*S, D) bf16
        x2 = matmul_bias_residual_layernorm(
            attn, lp["w_o"], lp["b_o"], x2, lp["ln1_g"], lp["ln1_b"])

        # --- feed-forward block (GELU fused into ff1 epilogue, residual+LN
        #     fused into ff2 epilogue) ---
        h = matmul_bias(x2, lp["w_ff1"], lp["b_ff1"], activation="gelu",
                        out_dtype=jnp.bfloat16)
        x2 = matmul_bias_residual_layernorm(
            h, lp["w_ff2"], lp["b_ff2"], x2, lp["ln2_g"], lp["ln2_b"])

    # final projection to vocab (kept f32 for parity with the torch reference)
    logits = matmul_bias(x2, params["fc_w"], params["fc_b"],
                         out_dtype=jnp.float32)         # (B*S, V)
    return logits.reshape(B, S, -1)


# ---------------------------------------------------------------------------
if __name__ == "__main__":
    vocab_size = 64
    d_model = 32
    nhead = 4
    num_layers = 2
    dim_feedforward = 64
    max_seq_len = 16
    B, S = 2, 8

    key = jax.random.PRNGKey(0)
    pkey, dkey = jax.random.split(key)
    params = init_params(pkey, vocab_size, d_model, num_layers,
                         dim_feedforward, max_seq_len)
    src = jax.random.randint(dkey, (B, S), 0, vocab_size, dtype=jnp.int32)

    fwd = jax.jit(functools.partial(forward, nhead=nhead))
    logits = fwd(params, src)
    jax.block_until_ready(logits)

    assert logits.shape == (B, S, vocab_size)
    assert bool(jnp.all(jnp.isfinite(logits)))
    print("KERNEL_OK")
</pallas_src>

<mosaic_0001>
module attributes {stable_mosaic.version = 11 : i64} {
  func.func @_matmul_bias_kernel(%arg0: i32, %arg1: i32, %arg2: i32, %arg3: memref<16x32xbf16, #tpu.memory_space<vmem>>, %arg4: memref<32x96xbf16, #tpu.memory_space<vmem>>, %arg5: memref<1x96xf32, #tpu.memory_space<vmem>>, %arg6: memref<16x96xbf16, #tpu.memory_space<vmem>>, %arg7: memref<16x96xf32, #tpu.memory_space<vmem>>) attributes {dimension_semantics = [#tpu.dimension_semantics<parallel>, #tpu.dimension_semantics<parallel>, #tpu.dimension_semantics<arbitrary>], iteration_bounds = array<i64: 1, 1, 1>, scalar_prefetch = 0 : i64, scratch_operands = 1 : i64, tpu.core_type = #tpu.core_type<tc>, window_params = [{transform_indices = @transform_0, window_bounds = array<i64: 16, 32>}, {transform_indices = @transform_1, window_bounds = array<i64: 32, 96>}, {transform_indices = @transform_2, window_bounds = array<i64: 1, 96>}, {transform_indices = @transform_3, window_bounds = array<i64: 16, 96>}]} {
    %c0_i32 = arith.constant 0 : i32
    %0 = arith.cmpi eq, %arg2, %c0_i32 : i32
    %1 = arith.extui %0 : i1 to i32
    %c0_i32_0 = arith.constant 0 : i32
    %2 = arith.cmpi ne, %1, %c0_i32_0 : i32
    scf.if %2 {
      %cst_10 = arith.constant 0.000000e+00 : f32
      %12 = vector.broadcast %cst_10 : f32 to vector<16x96xf32>
      %c0_11 = arith.constant 0 : index
      %c0_12 = arith.constant 0 : index
      %13 = vector.load %arg7[%c0_11, %c0_12] : memref<16x96xf32, #tpu.memory_space<vmem>>, vector<16x96xf32>
      tpu.vector_store %arg7[%c0_11, %c0_12], %12 {strides = array<i32>} : memref<16x96xf32, #tpu.memory_space<vmem>>, vector<16x96xf32>,
    } else {
    }
    %c0 = arith.constant 0 : index
    %c0_1 = arith.constant 0 : index
    %3 = vector.load %arg7[%c0, %c0_1] : memref<16x96xf32, #tpu.memory_space<vmem>>, vector<16x96xf32>
    %c0_2 = arith.constant 0 : index
    %c0_3 = arith.constant 0 : index
    %4 = vector.load %arg3[%c0_2, %c0_3] : memref<16x32xbf16, #tpu.memory_space<vmem>>, vector<16x32xbf16>
    %c0_4 = arith.constant 0 : index
    %c0_5 = arith.constant 0 : index
    %5 = vector.load %arg4[%c0_4, %c0_5] : memref<32x96xbf16, #tpu.memory_space<vmem>>, vector<32x96xbf16>
    %cst = arith.constant dense<0.000000e+00> : vector<16x96xf32>
    %6 = tpu.matmul %4, %5, %cst {dimension_numbers = #tpu.dot_dimension_numbers<[1], [0], [0], [1], [0, 0, 1, 1], [], []>} : vector<16x32xbf16>, vector<32x96xbf16>, vector<16x96xf32> -> vector<16x96xf32>
    %7 = arith.addf %3, %6 : vector<16x96xf32>
    %c0_6 = arith.constant 0 : index
    %c0_7 = arith.constant 0 : index
    %8 = vector.load %arg7[%c0_6, %c0_7] : memref<16x96xf32, #tpu.memory_space<vmem>>, vector<16x96xf32>
    tpu.vector_store %arg7[%c0_6, %c0_7], %7 {strides = array<i32>} : memref<16x96xf32, #tpu.memory_space<vmem>>, vector<16x96xf32>,
    %c0_i32_8 = arith.constant 0 : i32
    %9 = arith.cmpi eq, %arg2, %c0_i32_8 : i32
    %10 = arith.extui %9 : i1 to i32
    %c0_i32_9 = arith.constant 0 : i32
    %11 = arith.cmpi ne, %10, %c0_i32_9 : i32
    scf.if %11 {
      %c0_10 = arith.constant 0 : index
      %c0_11 = arith.constant 0 : index
      %12 = vector.load %arg7[%c0_10, %c0_11] : memref<16x96xf32, #tpu.memory_space<vmem>>, vector<16x96xf32>
      %c0_12 = arith.constant 0 : index
      %c0_13 = arith.constant 0 : index
      %13 = vector.load %arg5[%c0_12, %c0_13] : memref<1x96xf32, #tpu.memory_space<vmem>>, vector<1x96xf32>
      %14 = vector.broadcast %13 : vector<1x96xf32> to vector<16x96xf32>
      %15 = arith.addf %12, %14 : vector<16x96xf32>
      %16 = arith.truncf %15 : vector<16x96xf32> to vector<16x96xbf16>
      %c0_14 = arith.constant 0 : index
      %c0_15 = arith.constant 0 : index
      %17 = vector.load %arg6[%c0_14, %c0_15] : memref<16x96xbf16, #tpu.memory_space<vmem>>, vector<16x96xbf16>
      tpu.vector_store %arg6[%c0_14, %c0_15], %16 {strides = array<i32>} : memref<16x96xbf16, #tpu.memory_space<vmem>>, vector<16x96xbf16>,
    } else {
    }
    return
  }
  func.func @transform_0(%arg0: i32, %arg1: i32, %arg2: i32) -> (i32, i32) {
    %c0_i32 = arith.constant 0 : i32
    return %arg0, %arg2 : i32, i32
  }
  func.func @transform_1(%arg0: i32, %arg1: i32, %arg2: i32) -> (i32, i32) {
    %c0_i32 = arith.constant 0 : i32
    return %arg2, %arg1 : i32, i32
  }
  func.func @transform_2(%arg0: i32, %arg1: i32, %arg2: i32) -> (i32, i32) {
    %c0_i32 = arith.constant 0 : i32
    %c0_i32_0 = arith.constant 0 : i32
    return %c0_i32, %arg1 : i32, i32
  }
  func.func @transform_3(%arg0: i32, %arg1: i32, %arg2: i32) -> (i32, i32) {
    %c0_i32 = arith.constant 0 : i32
    return %arg0, %arg1 : i32, i32
  }
}

module attributes {stable_mosaic.version = 11 : i64} {
  func.func @_flash_causal_kernel(%arg0: i32, %arg1: i32, %arg2: i32, %arg3: memref<1x8x8xbf16, #tpu.memory_space<vmem>>, %arg4: memref<1x8x8xbf16, #tpu.memory_space<vmem>>, %arg5: memref<1x8x8xbf16, #tpu.memory_space<vmem>>, %arg6: memref<1x8x8xbf16, #tpu.memory_space<vmem>>, %arg7: memref<8x1xf32, #tpu.memory_space<vmem>>, %arg8: memref<8x1xf32, #tpu.memory_space<vmem>>, %arg9: memref<8x8xf32, #tpu.memory_space<vmem>>) attributes {dimension_semantics = [#tpu.dimension_semantics<parallel>, #tpu.dimension_semantics<parallel>, #tpu.dimension_semantics<arbitrary>], iteration_bounds = array<i64: 8, 1, 1>, scalar_prefetch = 0 : i64, scratch_operands = 3 : i64, tpu.core_type = #tpu.core_type<tc>, window_params = [{transform_indices = @transform_0, window_bounds = array<i64: 1, 8, 8>}, {transform_indices = @transform_1, window_bounds = array<i64: 1, 8, 8>}, {transform_indices = @transform_2, window_bounds = array<i64: 1, 8, 8>}, {transform_indices = @transform_3, window_bounds = array<i64: 1, 8, 8>}]} {
    %c0_i32 = arith.constant 0 : i32
    %0 = arith.cmpi eq, %arg2, %c0_i32 : i32
    %1 = arith.extui %0 : i1 to i32
    %c0_i32_0 = arith.constant 0 : i32
    %2 = arith.cmpi ne, %1, %c0_i32_0 : i32
    scf.if %2 {
      %cst = arith.constant -1.000000e+30 : f32
      %12 = vector.broadcast %cst : f32 to vector<8x1xf32>
      %c0 = arith.constant 0 : index
      %c0_5 = arith.constant 0 : index
      %13 = vector.load %arg7[%c0, %c0_5] : memref<8x1xf32, #tpu.memory_space<vmem>>, vector<8x1xf32>
      tpu.vector_store %arg7[%c0, %c0_5], %12 {strides = array<i32>} : memref<8x1xf32, #tpu.memory_space<vmem>>, vector<8x1xf32>,
      %cst_6 = arith.constant 0.000000e+00 : f32
      %14 = vector.broadcast %cst_6 : f32 to vector<8x1xf32>
      %c0_7 = arith.constant 0 : index
      %c0_8 = arith.constant 0 : index
      %15 = vector.load %arg8[%c0_7, %c0_8] : memref<8x1xf32, #tpu.memory_space<vmem>>, vector<8x1xf32>
      tpu.vector_store %arg8[%c0_7, %c0_8], %14 {strides = array<i32>} : memref<8x1xf32, #tpu.memory_space<vmem>>, vector<8x1xf32>,
      %cst_9 = arith.constant 0.000000e+00 : f32
      %16 = vector.broadcast %cst_9 : f32 to vector<8x8xf32>
      %c0_10 = arith.constant 0 : index
      %c0_11 = arith.constant 0 : index
      %17 = vector.load %arg9[%c0_10, %c0_11] : memref<8x8xf32, #tpu.memory_space<vmem>>, vector<8x8xf32>
      tpu.vector_store %arg9[%c0_10, %c0_11], %16 {strides = array<i32>} : memref<8x8xf32, #tpu.memory_space<vmem>>, vector<8x8xf32>,
    } else {
    }
    %c8_i32 = arith.constant 8 : i32
    %3 = arith.muli %arg1, %c8_i32 : i32
    %c8_i32_1 = arith.constant 8 : i32
    %4 = arith.muli %arg2, %c8_i32_1 : i32
    %c7_i32 = arith.constant 7 : i32
    %5 = arith.addi %3, %c7_i32 : i32
    %6 = arith.cmpi sle, %4, %5 : i32
    %7 = arith.extui %6 : i1 to i32
    %c0_i32_2 = arith.constant 0 : i32
    %8 = arith.cmpi ne, %7, %c0_i32_2 : i32
    scf.if %8 {
      %c0 = arith.constant 0 : index
      %c0_5 = arith.constant 0 : index
      %c0_6 = arith.constant 0 : index
      %12 = vector.load %arg3[%c0, %c0_5, %c0_6] : memref<1x8x8xbf16, #tpu.memory_space<vmem>>, vector<1x8x8xbf16>
      %13 = vector.shape_cast %12 : vector<1x8x8xbf16> to vector<8x8xbf16>
      %c0_7 = arith.constant 0 : index
      %c0_8 = arith.constant 0 : index
      %c0_9 = arith.constant 0 : index
      %14 = vector.load %arg4[%c0_7, %c0_8, %c0_9] : memref<1x8x8xbf16, #tpu.memory_space<vmem>>, vector<1x8x8xbf16>
      %15 = vector.shape_cast %14 : vector<1x8x8xbf16> to vector<8x8xbf16>
      %cst = arith.constant dense<0.000000e+00> : vector<8x8xf32>
      %16 = tpu.matmul %13, %15, %cst {dimension_numbers = #tpu.dot_dimension_numbers<[1], [1], [0], [0], [0, 0, 1, 0], [], []>} : vector<8x8xbf16>, vector<8x8xbf16>, vector<8x8xf32> -> vector<8x8xf32>
      %17 = tpu.iota {dimensions = array<i32: 0>} : vector<8x8xi32>
      %18 = vector.broadcast %3 : i32 to vector<8x8xi32>
      %19 = arith.addi %18, %17 : vector<8x8xi32>
      %20 = tpu.iota {dimensions = array<i32: 1>} : vector<8x8xi32>
      %21 = vector.broadcast %4 : i32 to vector<8x8xi32>
      %22 = arith.addi %21, %20 : vector<8x8xi32>
      %23 = arith.cmpi sgt, %22, %19 : vector<8x8xi32>
      %cst_10 = arith.constant -1.000000e+30 : f32
      %24 = vector.broadcast %cst_10 : f32 to vector<8x8xf32>
      %25 = arith.select %23, %24, %16 : vector<8x8xi1>, vector<8x8xf32>
      %c0_11 = arith.constant 0 : index
      %c0_12 = arith.constant 0 : index
      %26 = vector.load %arg7[%c0_11, %c0_12] : memref<8x1xf32, #tpu.memory_space<vmem>>, vector<8x1xf32>
      %cst_13 = arith.constant dense<0xFF800000> : vector<8xf32>
      %27 = vector.multi_reduction <maximumf>, %25, %cst_13 [1] : vector<8x8xf32> to vector<8xf32>
      %28 = vector.shape_cast %27 : vector<8xf32> to vector<8x1xf32>
      %29 = arith.maximumf %26, %28 : vector<8x1xf32>
      %30 = arith.subf %26, %29 : vector<8x1xf32>
      %31 = math.exp %30 : vector<8x1xf32>
      %32 = vector.broadcast %29 : vector<8x1xf32> to vector<8x8xf32>
      %33 = arith.subf %25, %32 : vector<8x8xf32>
      %34 = math.exp %33 : vector<8x8xf32>
      %c0_14 = arith.constant 0 : index
      %c0_15 = arith.constant 0 : index
      %35 = vector.load %arg8[%c0_14, %c0_15] : memref<8x1xf32, #tpu.memory_space<vmem>>, vector<8x1xf32>
      %36 = arith.mulf %31, %35 : vector<8x1xf32>
      %cst_16 = arith.constant dense<0.000000e+00> : vector<8xf32>
      %37 = vector.multi_reduction <add>, %34, %cst_16 [1] : vector<8x8xf32> to vector<8xf32>
      %38 = vector.shape_cast %37 : vector<8xf32> to vector<8x1xf32>
      %39 = arith.addf %36, %38 : vector<8x1xf32>
      %c0_17 = arith.constant 0 : index
      %c0_18 = arith.constant 0 : index
      %40 = vector.load %arg8[%c0_17, %c0_18] : memref<8x1xf32, #tpu.memory_space<vmem>>, vector<8x1xf32>
      tpu.vector_store %arg8[%c0_17, %c0_18], %39 {strides = array<i32>} : memref<8x1xf32, #tpu.memory_space<vmem>>, vector<8x1xf32>,
      %c0_19 = arith.constant 0 : index
      %c0_20 = arith.constant 0 : index
      %41 = vector.load %arg9[%c0_19, %c0_20] : memref<8x8xf32, #tpu.memory_space<vmem>>, vector<8x8xf32>
      %42 = vector.broadcast %31 : vector<8x1xf32> to vector<8x8xf32>
      %43 = arith.mulf %42, %41 : vector<8x8xf32>
      %44 = arith.truncf %34 : vector<8x8xf32> to vector<8x8xbf16>
      %c0_21 = arith.constant 0 : index
      %c0_22 = arith.constant 0 : index
      %c0_23 = arith.constant 0 : index
      %45 = vector.load %arg5[%c0_21, %c0_22, %c0_23] : memref<1x8x8xbf16, #tpu.memory_space<vmem>>, vector<1x8x8xbf16>
      %46 = vector.shape_cast %45 : vector<1x8x8xbf16> to vector<8x8xbf16>
      %cst_24 = arith.constant dense<0.000000e+00> : vector<8x8xf32>
      %47 = tpu.matmul %44, %46, %cst_24 {dimension_numbers = #tpu.dot_dimension_numbers<[1], [0], [0], [1], [0, 0, 1, 1], [], []>} : vector<8x8xbf16>, vector<8x8xbf16>, vector<8x8xf32> -> vector<8x8xf32>
      %48 = arith.addf %43, %47 : vector<8x8xf32>
      %c0_25 = arith.constant 0 : index
      %c0_26 = arith.constant 0 : index
      %49 = vector.load %arg9[%c0_25, %c0_26] : memref<8x8xf32, #tpu.memory_space<vmem>>, vector<8x8xf32>
      tpu.vector_store %arg9[%c0_25, %c0_26], %48 {strides = array<i32>} : memref<8x8xf32, #tpu.memory_space<vmem>>, vector<8x8xf32>,
      %c0_27 = arith.constant 0 : index
      %c0_28 = arith.constant 0 : index
      %50 = vector.load %arg7[%c0_27, %c0_28] : memref<8x1xf32, #tpu.memory_space<vmem>>, vector<8x1xf32>
      tpu.vector_store %arg7[%c0_27, %c0_28], %29 {strides = array<i32>} : memref<8x1xf32, #tpu.memory_space<vmem>>, vector<8x1xf32>,
    } else {
    }
    %c0_i32_3 = arith.constant 0 : i32
    %9 = arith.cmpi eq, %arg2, %c0_i32_3 : i32
    %10 = arith.extui %9 : i1 to i32
    %c0_i32_4 = arith.constant 0 : i32
    %11 = arith.cmpi ne, %10, %c0_i32_4 : i32
    scf.if %11 {
      %c0 = arith.constant 0 : index
      %c0_5 = arith.constant 0 : index
      %12 = vector.load %arg9[%c0, %c0_5] : memref<8x8xf32, #tpu.memory_space<vmem>>, vector<8x8xf32>
      %c0_6 = arith.constant 0 : index
      %c0_7 = arith.constant 0 : index
      %13 = vector.load %arg8[%c0_6, %c0_7] : memref<8x1xf32, #tpu.memory_space<vmem>>, vector<8x1xf32>
      %14 = tpu.reciprocal %13 {approx = true} : vector<8x1xf32> -> vector<8x1xf32>
      %15 = vector.broadcast %14 : vector<8x1xf32> to vector<8x8xf32>
      %16 = arith.mulf %12, %15 : vector<8x8xf32>
      %17 = arith.truncf %16 : vector<8x8xf32> to vector<8x8xbf16>
      %c0_8 = arith.constant 0 : index
      %c0_9 = arith.constant 0 : index
      %c0_10 = arith.constant 0 : index
      %18 = vector.load %arg6[%c0_8, %c0_9, %c0_10] : memref<1x8x8xbf16, #tpu.memory_space<vmem>>, vector<1x8x8xbf16>
      %19 = vector.shape_cast %18 : vector<1x8x8xbf16> to vector<8x8xbf16>
      %20 = vector.shape_cast %17 : vector<8x8xbf16> to vector<1x8x8xbf16>
      tpu.vector_store %arg6[%c0_8, %c0_9, %c0_10], %20 {strides = array<i32>} : memref<1x8x8xbf16, #tpu.memory_space<vmem>>, vector<1x8x8xbf16>,
    } else {
    }
    return
  }
  func.func @transform_0(%arg0: i32, %arg1: i32, %arg2: i32) -> (i32, i32, i32) {
    %c0_i32 = arith.constant 0 : i32
    %c0_i32_0 = arith.constant 0 : i32
    return %arg0, %arg1, %c0_i32 : i32, i32, i32
  }
  func.func @transform_1(%arg0: i32, %arg1: i32, %arg2: i32) -> (i32, i32, i32) {
    %c0_i32 = arith.constant 0 : i32
    %c0_i32_0 = arith.constant 0 : i32
    return %arg0, %arg2, %c0_i32 : i32, i32, i32
  }
  func.func @transform_2(%arg0: i32, %arg1: i32, %arg2: i32) -> (i32, i32, i32) {
    %c0_i32 = arith.constant 0 : i32
    %c0_i32_0 = arith.constant 0 : i32
    return %arg0, %arg2, %c0_i32 : i32, i32, i32
  }
  func.func @transform_3(%arg0: i32, %arg1: i32, %arg2: i32) -> (i32, i32, i32) {
    %c0_i32 = arith.constant 0 : i32
    %c0_i32_0 = arith.constant 0 : i32
    return %arg0, %arg1, %c0_i32 : i32, i32, i32
  }
}

module attributes {stable_mosaic.version = 11 : i64} {
  func.func @_matmul_res_ln_kernel(%arg0: i32, %arg1: i32, %arg2: memref<16x32xbf16, #tpu.memory_space<vmem>>, %arg3: memref<32x32xbf16, #tpu.memory_space<vmem>>, %arg4: memref<1x32xf32, #tpu.memory_space<vmem>>, %arg5: memref<16x32xbf16, #tpu.memory_space<vmem>>, %arg6: memref<1x32xf32, #tpu.memory_space<vmem>>, %arg7: memref<1x32xf32, #tpu.memory_space<vmem>>, %arg8: memref<16x32xbf16, #tpu.memory_space<vmem>>, %arg9: memref<16x32xf32, #tpu.memory_space<vmem>>) attributes {dimension_semantics = [#tpu.dimension_semantics<parallel>, #tpu.dimension_semantics<arbitrary>], iteration_bounds = array<i64: 1, 1>, scalar_prefetch = 0 : i64, scratch_operands = 1 : i64, tpu.core_type = #tpu.core_type<tc>, window_params = [{transform_indices = @transform_0, window_bounds = array<i64: 16, 32>}, {transform_indices = @transform_1, window_bounds = array<i64: 32, 32>}, {pipeline_mode = #tpu.pipeline_mode<synchronous>, transform_indices = @transform_2, window_bounds = array<i64: 1, 32>}, {transform_indices = @transform_3, window_bounds = array<i64: 16, 32>}, {pipeline_mode = #tpu.pipeline_mode<synchronous>, transform_indices = @transform_4, window_bounds = array<i64: 1, 32>}, {pipeline_mode = #tpu.pipeline_mode<synchronous>, transform_indices = @transform_5, window_bounds = array<i64: 1, 32>}, {transform_indices = @transform_6, window_bounds = array<i64: 16, 32>}]} {
    %c0_i32 = arith.constant 0 : i32
    %0 = arith.cmpi eq, %arg1, %c0_i32 : i32
    %1 = arith.extui %0 : i1 to i32
    %c0_i32_0 = arith.constant 0 : i32
    %2 = arith.cmpi ne, %1, %c0_i32_0 : i32
    scf.if %2 {
      %cst_10 = arith.constant 0.000000e+00 : f32
      %12 = vector.broadcast %cst_10 : f32 to vector<16x32xf32>
      %c0_11 = arith.constant 0 : index
      %c0_12 = arith.constant 0 : index
      %13 = vector.load %arg9[%c0_11, %c0_12] : memref<16x32xf32, #tpu.memory_space<vmem>>, vector<16x32xf32>
      tpu.vector_store %arg9[%c0_11, %c0_12], %12 {strides = array<i32>} : memref<16x32xf32, #tpu.memory_space<vmem>>, vector<16x32xf32>,
    } else {
    }
    %c0 = arith.constant 0 : index
    %c0_1 = arith.constant 0 : index
    %3 = vector.load %arg9[%c0, %c0_1] : memref<16x32xf32, #tpu.memory_space<vmem>>, vector<16x32xf32>
    %c0_2 = arith.constant 0 : index
    %c0_3 = arith.constant 0 : index
    %4 = vector.load %arg2[%c0_2, %c0_3] : memref<16x32xbf16, #tpu.memory_space<vmem>>, vector<16x32xbf16>
    %c0_4 = arith.constant 0 : index
    %c0_5 = arith.constant 0 : index
    %5 = vector.load %arg3[%c0_4, %c0_5] : memref<32x32xbf16, #tpu.memory_space<vmem>>, vector<32x32xbf16>
    %cst = arith.constant dense<0.000000e+00> : vector<16x32xf32>
    %6 = tpu.matmul %4, %5, %cst {dimension_numbers = #tpu.dot_dimension_numbers<[1], [0], [0], [1], [0, 0, 1, 1], [], []>} : vector<16x32xbf16>, vector<32x32xbf16>, vector<16x32xf32> -> vector<16x32xf32>
    %7 = arith.addf %3, %6 : vector<16x32xf32>
    %c0_6 = arith.constant 0 : index
    %c0_7 = arith.constant 0 : index
    %8 = vector.load %arg9[%c0_6, %c0_7] : memref<16x32xf32, #tpu.memory_space<vmem>>, vector<16x32xf32>
    tpu.vector_store %arg9[%c0_6, %c0_7], %7 {strides = array<i32>} : memref<16x32xf32, #tpu.memory_space<vmem>>, vector<16x32xf32>,
    %c0_i32_8 = arith.constant 0 : i32
    %9 = arith.cmpi eq, %arg1, %c0_i32_8 : i32
    %10 = arith.extui %9 : i1 to i32
    %c0_i32_9 = arith.constant 0 : i32
    %11 = arith.cmpi ne, %10, %c0_i32_9 : i32
    scf.if %11 {
      %c0_10 = arith.constant 0 : index
      %c0_11 = arith.constant 0 : index
      %12 = vector.load %arg9[%c0_10, %c0_11] : memref<16x32xf32, #tpu.memory_space<vmem>>, vector<16x32xf32>
      %c0_12 = arith.constant 0 : index
      %c0_13 = arith.constant 0 : index
      %13 = vector.load %arg4[%c0_12, %c0_13] : memref<1x32xf32, #tpu.memory_space<vmem>>, vector<1x32xf32>
      %14 = vector.broadcast %13 : vector<1x32xf32> to vector<16x32xf32>
      %15 = arith.addf %12, %14 : vector<16x32xf32>
      %c0_14 = arith.constant 0 : index
      %c0_15 = arith.constant 0 : index
      %16 = vector.load %arg5[%c0_14, %c0_15] : memref<16x32xbf16, #tpu.memory_space<vmem>>, vector<16x32xbf16>
      %17 = arith.extf %16 : vector<16x32xbf16> to vector<16x32xf32>
      %18 = arith.addf %15, %17 : vector<16x32xf32>
      %cst_16 = arith.constant dense<0.000000e+00> : vector<16xf32>
      %19 = vector.multi_reduction <add>, %18, %cst_16 [1] : vector<16x32xf32> to vector<16xf32>
      %20 = vector.shape_cast %19 : vector<16xf32> to vector<16x1xf32>
      %cst_17 = arith.constant 3.200000e+01 : f32
      %21 = vector.broadcast %cst_17 : f32 to vector<16x1xf32>
      %22 = arith.divf %20, %21 : vector<16x1xf32>
      %23 = vector.broadcast %22 : vector<16x1xf32> to vector<16x32xf32>
      %24 = arith.subf %18, %23 : vector<16x32xf32>
      %25 = arith.mulf %24, %24 : vector<16x32xf32>
      %cst_18 = arith.constant dense<0.000000e+00> : vector<16xf32>
      %26 = vector.multi_reduction <add>, %25, %cst_18 [1] : vector<16x32xf32> to vector<16xf32>
      %27 = vector.shape_cast %26 : vector<16xf32> to vector<16x1xf32>
      %cst_19 = arith.constant 3.200000e+01 : f32
      %28 = vector.broadcast %cst_19 : f32 to vector<16x1xf32>
      %29 = arith.divf %27, %28 : vector<16x1xf32>
      %30 = vector.broadcast %22 : vector<16x1xf32> to vector<16x32xf32>
      %31 = arith.subf %18, %30 : vector<16x32xf32>
      %cst_20 = arith.constant 9.99999974E-6 : f32
      %32 = vector.broadcast %cst_20 : f32 to vector<16x1xf32>
      %33 = arith.addf %29, %32 : vector<16x1xf32>
      %34 = math.rsqrt %33 : vector<16x1xf32>
      %35 = vector.broadcast %34 : vector<16x1xf32> to vector<16x32xf32>
      %36 = arith.mulf %31, %35 : vector<16x32xf32>
      %c0_21 = arith.constant 0 : index
      %c0_22 = arith.constant 0 : index
      %37 = vector.load %arg6[%c0_21, %c0_22] : memref<1x32xf32, #tpu.memory_space<vmem>>, vector<1x32xf32>
      %38 = vector.broadcast %37 : vector<1x32xf32> to vector<16x32xf32>
      %39 = arith.mulf %36, %38 : vector<16x32xf32>
      %c0_23 = arith.constant 0 : index
      %c0_24 = arith.constant 0 : index
      %40 = vector.load %arg7[%c0_23, %c0_24] : memref<1x32xf32, #tpu.memory_space<vmem>>, vector<1x32xf32>
      %41 = vector.broadcast %40 : vector<1x32xf32> to vector<16x32xf32>
      %42 = arith.addf %39, %41 : vector<16x32xf32>
      %43 = arith.truncf %42 : vector<16x32xf32> to vector<16x32xbf16>
      %c0_25 = arith.constant 0 : index
      %c0_26 = arith.constant 0 : index
      %44 = vector.load %arg8[%c0_25, %c0_26] : memref<16x32xbf16, #tpu.memory_space<vmem>>, vector<16x32xbf16>
      tpu.vector_store %arg8[%c0_25, %c0_26], %43 {strides = array<i32>} : memref<16x32xbf16, #tpu.memory_space<vmem>>, vector<16x32xbf16>,
    } else {
    }
    return
  }
  func.func @transform_0(%arg0: i32, %arg1: i32) -> (i32, i32) {
    %c0_i32 = arith.constant 0 : i32
    return %arg0, %arg1 : i32, i32
  }
  func.func @transform_1(%arg0: i32, %arg1: i32) -> (i32, i32) {
    %c0_i32 = arith.constant 0 : i32
    %c0_i32_0 = arith.constant 0 : i32
    return %arg1, %c0_i32 : i32, i32
  }
  func.func @transform_2(%arg0: i32, %arg1: i32) -> (i32, i32) {
    %c0_i32 = arith.constant 0 : i32
    %c0_i32_0 = arith.constant 0 : i32
    %c0_i32_1 = arith.constant 0 : i32
    return %c0_i32, %c0_i32_0 : i32, i32
  }
  func.func @transform_3(%arg0: i32, %arg1: i32) -> (i32, i32) {
    %c0_i32 = arith.constant 0 : i32
    %c0_i32_0 = arith.constant 0 : i32
    return %arg0, %c0_i32 : i32, i32
  }
  func.func @transform_4(%arg0: i32, %arg1: i32) -> (i32, i32) {
    %c0_i32 = arith.constant 0 : i32
    %c0_i32_0 = arith.constant 0 : i32
    %c0_i32_1 = arith.constant 0 : i32
    return %c0_i32, %c0_i32_0 : i32, i32
  }
  func.func @transform_5(%arg0: i32, %arg1: i32) -> (i32, i32) {
    %c0_i32 = arith.constant 0 : i32
    %c0_i32_0 = arith.constant 0 : i32
    %c0_i32_1 = arith.constant 0 : i32
    return %c0_i32, %c0_i32_0 : i32, i32
  }
  func.func @transform_6(%arg0: i32, %arg1: i32) -> (i32, i32) {
    %c0_i32 = arith.constant 0 : i32
    %c0_i32_0 = arith.constant 0 : i32
    return %arg0, %c0_i32 : i32, i32
  }
}

module attributes {stable_mosaic.version = 11 : i64} {
  func.func @_matmul_bias_kernel(%arg0: i32, %arg1: i32, %arg2: i32, %arg3: memref<16x32xbf16, #tpu.memory_space<vmem>>, %arg4: memref<32x64xbf16, #tpu.memory_space<vmem>>, %arg5: memref<1x64xf32, #tpu.memory_space<vmem>>, %arg6: memref<16x64xbf16, #tpu.memory_space<vmem>>, %arg7: memref<16x64xf32, #tpu.memory_space<vmem>>) attributes {dimension_semantics = [#tpu.dimension_semantics<parallel>, #tpu.dimension_semantics<parallel>, #tpu.dimension_semantics<arbitrary>], iteration_bounds = array<i64: 1, 1, 1>, scalar_prefetch = 0 : i64, scratch_operands = 1 : i64, tpu.core_type = #tpu.core_type<tc>, window_params = [{transform_indices = @transform_0, window_bounds = array<i64: 16, 32>}, {transform_indices = @transform_1, window_bounds = array<i64: 32, 64>}, {transform_indices = @transform_2, window_bounds = array<i64: 1, 64>}, {transform_indices = @transform_3, window_bounds = array<i64: 16, 64>}]} {
    %c0_i32 = arith.constant 0 : i32
    %0 = arith.cmpi eq, %arg2, %c0_i32 : i32
    %1 = arith.extui %0 : i1 to i32
    %c0_i32_0 = arith.constant 0 : i32
    %2 = arith.cmpi ne, %1, %c0_i32_0 : i32
    scf.if %2 {
      %cst_10 = arith.constant 0.000000e+00 : f32
      %12 = vector.broadcast %cst_10 : f32 to vector<16x64xf32>
      %c0_11 = arith.constant 0 : index
      %c0_12 = arith.constant 0 : index
      %13 = vector.load %arg7[%c0_11, %c0_12] : memref<16x64xf32, #tpu.memory_space<vmem>>, vector<16x64xf32>
      tpu.vector_store %arg7[%c0_11, %c0_12], %12 {strides = array<i32>} : memref<16x64xf32, #tpu.memory_space<vmem>>, vector<16x64xf32>,
    } else {
    }
    %c0 = arith.constant 0 : index
    %c0_1 = arith.constant 0 : index
    %3 = vector.load %arg7[%c0, %c0_1] : memref<16x64xf32, #tpu.memory_space<vmem>>, vector<16x64xf32>
    %c0_2 = arith.constant 0 : index
    %c0_3 = arith.constant 0 : index
    %4 = vector.load %arg3[%c0_2, %c0_3] : memref<16x32xbf16, #tpu.memory_space<vmem>>, vector<16x32xbf16>
    %c0_4 = arith.constant 0 : index
    %c0_5 = arith.constant 0 : index
    %5 = vector.load %arg4[%c0_4, %c0_5] : memref<32x64xbf16, #tpu.memory_space<vmem>>, vector<32x64xbf16>
    %cst = arith.constant dense<0.000000e+00> : vector<16x64xf32>
    %6 = tpu.matmul %4, %5, %cst {dimension_numbers = #tpu.dot_dimension_numbers<[1], [0], [0], [1], [0, 0, 1, 1], [], []>} : vector<16x32xbf16>, vector<32x64xbf16>, vector<16x64xf32> -> vector<16x64xf32>
    %7 = arith.addf %3, %6 : vector<16x64xf32>
    %c0_6 = arith.constant 0 : index
    %c0_7 = arith.constant 0 : index
    %8 = vector.load %arg7[%c0_6, %c0_7] : memref<16x64xf32, #tpu.memory_space<vmem>>, vector<16x64xf32>
    tpu.vector_store %arg7[%c0_6, %c0_7], %7 {strides = array<i32>} : memref<16x64xf32, #tpu.memory_space<vmem>>, vector<16x64xf32>,
    %c0_i32_8 = arith.constant 0 : i32
    %9 = arith.cmpi eq, %arg2, %c0_i32_8 : i32
    %10 = arith.extui %9 : i1 to i32
    %c0_i32_9 = arith.constant 0 : i32
    %11 = arith.cmpi ne, %10, %c0_i32_9 : i32
    scf.if %11 {
      %c0_10 = arith.constant 0 : index
      %c0_11 = arith.constant 0 : index
      %12 = vector.load %arg7[%c0_10, %c0_11] : memref<16x64xf32, #tpu.memory_space<vmem>>, vector<16x64xf32>
      %c0_12 = arith.constant 0 : index
      %c0_13 = arith.constant 0 : index
      %13 = vector.load %arg5[%c0_12, %c0_13] : memref<1x64xf32, #tpu.memory_space<vmem>>, vector<1x64xf32>
      %14 = vector.broadcast %13 : vector<1x64xf32> to vector<16x64xf32>
      %15 = arith.addf %12, %14 : vector<16x64xf32>
      %cst_14 = arith.constant 5.000000e-01 : f32
      %16 = vector.broadcast %cst_14 : f32 to vector<16x64xf32>
      %17 = arith.mulf %16, %15 : vector<16x64xf32>
      %cst_15 = arith.constant 0.707106769 : f32
      %18 = vector.broadcast %cst_15 : f32 to vector<16x64xf32>
      %19 = arith.mulf %15, %18 : vector<16x64xf32>
      %20 = math.erf %19 : vector<16x64xf32>
      %cst_16 = arith.constant 1.000000e+00 : f32
      %21 = vector.broadcast %cst_16 : f32 to vector<16x64xf32>
      %22 = arith.addf %21, %20 : vector<16x64xf32>
      %23 = arith.mulf %17, %22 : vector<16x64xf32>
      %24 = arith.truncf %23 : vector<16x64xf32> to vector<16x64xbf16>
      %c0_17 = arith.constant 0 : index
      %c0_18 = arith.constant 0 : index
      %25 = vector.load %arg6[%c0_17, %c0_18] : memref<16x64xbf16, #tpu.memory_space<vmem>>, vector<16x64xbf16>
      tpu.vector_store %arg6[%c0_17, %c0_18], %24 {strides = array<i32>} : memref<16x64xbf16, #tpu.memory_space<vmem>>, vector<16x64xbf16>,
    } else {
    }
    return
  }
  func.func @transform_0(%arg0: i32, %arg1: i32, %arg2: i32) -> (i32, i32) {
    %c0_i32 = arith.constant 0 : i32
    return %arg0, %arg2 : i32, i32
  }
  func.func @transform_1(%arg0: i32, %arg1: i32, %arg2: i32) -> (i32, i32) {
    %c0_i32 = arith.constant 0 : i32
    return %arg2, %arg1 : i32, i32
  }
  func.func @transform_2(%arg0: i32, %arg1: i32, %arg2: i32) -> (i32, i32) {
    %c0_i32 = arith.constant 0 : i32
    %c0_i32_0 = arith.constant 0 : i32
    return %c0_i32, %arg1 : i32, i32
  }
  func.func @transform_3(%arg0: i32, %arg1: i32, %arg2: i32) -> (i32, i32) {
    %c0_i32 = arith.constant 0 : i32
    return %arg0, %arg1 : i32, i32
  }
}

module attributes {stable_mosaic.version = 11 : i64} {
  func.func @_matmul_bias_kernel(%arg0: i32, %arg1: i32, %arg2: i32, %arg3: memref<16x32xbf16, #tpu.memory_space<vmem>>, %arg4: memref<32x64xbf16, #tpu.memory_space<vmem>>, %arg5: memref<1x64xf32, #tpu.memory_space<vmem>>, %arg6: memref<16x64xf32, #tpu.memory_space<vmem>>, %arg7: memref<16x64xf32, #tpu.memory_space<vmem>>) attributes {dimension_semantics = [#tpu.dimension_semantics<parallel>, #tpu.dimension_semantics<parallel>, #tpu.dimension_semantics<arbitrary>], iteration_bounds = array<i64: 1, 1, 1>, scalar_prefetch = 0 : i64, scratch_operands = 1 : i64, tpu.core_type = #tpu.core_type<tc>, window_params = [{transform_indices = @transform_0, window_bounds = array<i64: 16, 32>}, {transform_indices = @transform_1, window_bounds = array<i64: 32, 64>}, {transform_indices = @transform_2, window_bounds = array<i64: 1, 64>}, {transform_indices = @transform_3, window_bounds = array<i64: 16, 64>}]} {
    %c0_i32 = arith.constant 0 : i32
    %0 = arith.cmpi eq, %arg2, %c0_i32 : i32
    %1 = arith.extui %0 : i1 to i32
    %c0_i32_0 = arith.constant 0 : i32
    %2 = arith.cmpi ne, %1, %c0_i32_0 : i32
    scf.if %2 {
      %cst_10 = arith.constant 0.000000e+00 : f32
      %12 = vector.broadcast %cst_10 : f32 to vector<16x64xf32>
      %c0_11 = arith.constant 0 : index
      %c0_12 = arith.constant 0 : index
      %13 = vector.load %arg7[%c0_11, %c0_12] : memref<16x64xf32, #tpu.memory_space<vmem>>, vector<16x64xf32>
      tpu.vector_store %arg7[%c0_11, %c0_12], %12 {strides = array<i32>} : memref<16x64xf32, #tpu.memory_space<vmem>>, vector<16x64xf32>,
    } else {
    }
    %c0 = arith.constant 0 : index
    %c0_1 = arith.constant 0 : index
    %3 = vector.load %arg7[%c0, %c0_1] : memref<16x64xf32, #tpu.memory_space<vmem>>, vector<16x64xf32>
    %c0_2 = arith.constant 0 : index
    %c0_3 = arith.constant 0 : index
    %4 = vector.load %arg3[%c0_2, %c0_3] : memref<16x32xbf16, #tpu.memory_space<vmem>>, vector<16x32xbf16>
    %c0_4 = arith.constant 0 : index
    %c0_5 = arith.constant 0 : index
    %5 = vector.load %arg4[%c0_4, %c0_5] : memref<32x64xbf16, #tpu.memory_space<vmem>>, vector<32x64xbf16>
    %cst = arith.constant dense<0.000000e+00> : vector<16x64xf32>
    %6 = tpu.matmul %4, %5, %cst {dimension_numbers = #tpu.dot_dimension_numbers<[1], [0], [0], [1], [0, 0, 1, 1], [], []>} : vector<16x32xbf16>, vector<32x64xbf16>, vector<16x64xf32> -> vector<16x64xf32>
    %7 = arith.addf %3, %6 : vector<16x64xf32>
    %c0_6 = arith.constant 0 : index
    %c0_7 = arith.constant 0 : index
    %8 = vector.load %arg7[%c0_6, %c0_7] : memref<16x64xf32, #tpu.memory_space<vmem>>, vector<16x64xf32>
    tpu.vector_store %arg7[%c0_6, %c0_7], %7 {strides = array<i32>} : memref<16x64xf32, #tpu.memory_space<vmem>>, vector<16x64xf32>,
    %c0_i32_8 = arith.constant 0 : i32
    %9 = arith.cmpi eq, %arg2, %c0_i32_8 : i32
    %10 = arith.extui %9 : i1 to i32
    %c0_i32_9 = arith.constant 0 : i32
    %11 = arith.cmpi ne, %10, %c0_i32_9 : i32
    scf.if %11 {
      %c0_10 = arith.constant 0 : index
      %c0_11 = arith.constant 0 : index
      %12 = vector.load %arg7[%c0_10, %c0_11] : memref<16x64xf32, #tpu.memory_space<vmem>>, vector<16x64xf32>
      %c0_12 = arith.constant 0 : index
      %c0_13 = arith.constant 0 : index
      %13 = vector.load %arg5[%c0_12, %c0_13] : memref<1x64xf32, #tpu.memory_space<vmem>>, vector<1x64xf32>
      %14 = vector.broadcast %13 : vector<1x64xf32> to vector<16x64xf32>
      %15 = arith.addf %12, %14 : vector<16x64xf32>
      %c0_14 = arith.constant 0 : index
      %c0_15 = arith.constant 0 : index
      %16 = vector.load %arg6[%c0_14, %c0_15] : memref<16x64xf32, #tpu.memory_space<vmem>>, vector<16x64xf32>
      tpu.vector_store %arg6[%c0_14, %c0_15], %15 {strides = array<i32>} : memref<16x64xf32, #tpu.memory_space<vmem>>, vector<16x64xf32>,
    } else {
    }
    return
  }
  func.func @transform_0(%arg0: i32, %arg1: i32, %arg2: i32) -> (i32, i32) {
    %c0_i32 = arith.constant 0 : i32
    return %arg0, %arg2 : i32, i32
  }
  func.func @transform_1(%arg0: i32, %arg1: i32, %arg2: i32) -> (i32, i32) {
    %c0_i32 = arith.constant 0 : i32
    return %arg2, %arg1 : i32, i32
  }
  func.func @transform_2(%arg0: i32, %arg1: i32, %arg2: i32) -> (i32, i32) {
    %c0_i32 = arith.constant 0 : i32
    %c0_i32_0 = arith.constant 0 : i32
    return %c0_i32, %arg1 : i32, i32
  }
  func.func @transform_3(%arg0: i32, %arg1: i32, %arg2: i32) -> (i32, i32) {
    %c0_i32 = arith.constant 0 : i32
    return %arg0, %arg1 : i32, i32
  }
}

module attributes {stable_mosaic.version = 11 : i64} {
  func.func @_matmul_res_ln_kernel(%arg0: i32, %arg1: i32, %arg2: memref<16x64xbf16, #tpu.memory_space<vmem>>, %arg3: memref<64x32xbf16, #tpu.memory_space<vmem>>, %arg4: memref<1x32xf32, #tpu.memory_space<vmem>>, %arg5: memref<16x32xbf16, #tpu.memory_space<vmem>>, %arg6: memref<1x32xf32, #tpu.memory_space<vmem>>, %arg7: memref<1x32xf32, #tpu.memory_space<vmem>>, %arg8: memref<16x32xbf16, #tpu.memory_space<vmem>>, %arg9: memref<16x32xf32, #tpu.memory_space<vmem>>) attributes {dimension_semantics = [#tpu.dimension_semantics<parallel>, #tpu.dimension_semantics<arbitrary>], iteration_bounds = array<i64: 1, 1>, scalar_prefetch = 0 : i64, scratch_operands = 1 : i64, tpu.core_type = #tpu.core_type<tc>, window_params = [{transform_indices = @transform_0, window_bounds = array<i64: 16, 64>}, {transform_indices = @transform_1, window_bounds = array<i64: 64, 32>}, {pipeline_mode = #tpu.pipeline_mode<synchronous>, transform_indices = @transform_2, window_bounds = array<i64: 1, 32>}, {transform_indices = @transform_3, window_bounds = array<i64: 16, 32>}, {pipeline_mode = #tpu.pipeline_mode<synchronous>, transform_indices = @transform_4, window_bounds = array<i64: 1, 32>}, {pipeline_mode = #tpu.pipeline_mode<synchronous>, transform_indices = @transform_5, window_bounds = array<i64: 1, 32>}, {transform_indices = @transform_6, window_bounds = array<i64: 16, 32>}]} {
    %c0_i32 = arith.constant 0 : i32
    %0 = arith.cmpi eq, %arg1, %c0_i32 : i32
    %1 = arith.extui %0 : i1 to i32
    %c0_i32_0 = arith.constant 0 : i32
    %2 = arith.cmpi ne, %1, %c0_i32_0 : i32
    scf.if %2 {
      %cst_10 = arith.constant 0.000000e+00 : f32
      %12 = vector.broadcast %cst_10 : f32 to vector<16x32xf32>
      %c0_11 = arith.constant 0 : index
      %c0_12 = arith.constant 0 : index
      %13 = vector.load %arg9[%c0_11, %c0_12] : memref<16x32xf32, #tpu.memory_space<vmem>>, vector<16x32xf32>
      tpu.vector_store %arg9[%c0_11, %c0_12], %12 {strides = array<i32>} : memref<16x32xf32, #tpu.memory_space<vmem>>, vector<16x32xf32>,
    } else {
    }
    %c0 = arith.constant 0 : index
    %c0_1 = arith.constant 0 : index
    %3 = vector.load %arg9[%c0, %c0_1] : memref<16x32xf32, #tpu.memory_space<vmem>>, vector<16x32xf32>
    %c0_2 = arith.constant 0 : index
    %c0_3 = arith.constant 0 : index
    %4 = vector.load %arg2[%c0_2, %c0_3] : memref<16x64xbf16, #tpu.memory_space<vmem>>, vector<16x64xbf16>
    %c0_4 = arith.constant 0 : index
    %c0_5 = arith.constant 0 : index
    %5 = vector.load %arg3[%c0_4, %c0_5] : memref<64x32xbf16, #tpu.memory_space<vmem>>, vector<64x32xbf16>
    %cst = arith.constant dense<0.000000e+00> : vector<16x32xf32>
    %6 = tpu.matmul %4, %5, %cst {dimension_numbers = #tpu.dot_dimension_numbers<[1], [0], [0], [1], [0, 0, 1, 1], [], []>} : vector<16x64xbf16>, vector<64x32xbf16>, vector<16x32xf32> -> vector<16x32xf32>
    %7 = arith.addf %3, %6 : vector<16x32xf32>
    %c0_6 = arith.constant 0 : index
    %c0_7 = arith.constant 0 : index
    %8 = vector.load %arg9[%c0_6, %c0_7] : memref<16x32xf32, #tpu.memory_space<vmem>>, vector<16x32xf32>
    tpu.vector_store %arg9[%c0_6, %c0_7], %7 {strides = array<i32>} : memref<16x32xf32, #tpu.memory_space<vmem>>, vector<16x32xf32>,
    %c0_i32_8 = arith.constant 0 : i32
    %9 = arith.cmpi eq, %arg1, %c0_i32_8 : i32
    %10 = arith.extui %9 : i1 to i32
    %c0_i32_9 = arith.constant 0 : i32
    %11 = arith.cmpi ne, %10, %c0_i32_9 : i32
    scf.if %11 {
      %c0_10 = arith.constant 0 : index
      %c0_11 = arith.constant 0 : index
      %12 = vector.load %arg9[%c0_10, %c0_11] : memref<16x32xf32, #tpu.memory_space<vmem>>, vector<16x32xf32>
      %c0_12 = arith.constant 0 : index
      %c0_13 = arith.constant 0 : index
      %13 = vector.load %arg4[%c0_12, %c0_13] : memref<1x32xf32, #tpu.memory_space<vmem>>, vector<1x32xf32>
      %14 = vector.broadcast %13 : vector<1x32xf32> to vector<16x32xf32>
      %15 = arith.addf %12, %14 : vector<16x32xf32>
      %c0_14 = arith.constant 0 : index
      %c0_15 = arith.constant 0 : index
      %16 = vector.load %arg5[%c0_14, %c0_15] : memref<16x32xbf16, #tpu.memory_space<vmem>>, vector<16x32xbf16>
      %17 = arith.extf %16 : vector<16x32xbf16> to vector<16x32xf32>
      %18 = arith.addf %15, %17 : vector<16x32xf32>
      %cst_16 = arith.constant dense<0.000000e+00> : vector<16xf32>
      %19 = vector.multi_reduction <add>, %18, %cst_16 [1] : vector<16x32xf32> to vector<16xf32>
      %20 = vector.shape_cast %19 : vector<16xf32> to vector<16x1xf32>
      %cst_17 = arith.constant 3.200000e+01 : f32
      %21 = vector.broadcast %cst_17 : f32 to vector<16x1xf32>
      %22 = arith.divf %20, %21 : vector<16x1xf32>
      %23 = vector.broadcast %22 : vector<16x1xf32> to vector<16x32xf32>
      %24 = arith.subf %18, %23 : vector<16x32xf32>
      %25 = arith.mulf %24, %24 : vector<16x32xf32>
      %cst_18 = arith.constant dense<0.000000e+00> : vector<16xf32>
      %26 = vector.multi_reduction <add>, %25, %cst_18 [1] : vector<16x32xf32> to vector<16xf32>
      %27 = vector.shape_cast %26 : vector<16xf32> to vector<16x1xf32>
      %cst_19 = arith.constant 3.200000e+01 : f32
      %28 = vector.broadcast %cst_19 : f32 to vector<16x1xf32>
      %29 = arith.divf %27, %28 : vector<16x1xf32>
      %30 = vector.broadcast %22 : vector<16x1xf32> to vector<16x32xf32>
      %31 = arith.subf %18, %30 : vector<16x32xf32>
      %cst_20 = arith.constant 9.99999974E-6 : f32
      %32 = vector.broadcast %cst_20 : f32 to vector<16x1xf32>
      %33 = arith.addf %29, %32 : vector<16x1xf32>
      %34 = math.rsqrt %33 : vector<16x1xf32>
      %35 = vector.broadcast %34 : vector<16x1xf32> to vector<16x32xf32>
      %36 = arith.mulf %31, %35 : vector<16x32xf32>
      %c0_21 = arith.constant 0 : index
      %c0_22 = arith.constant 0 : index
      %37 = vector.load %arg6[%c0_21, %c0_22] : memref<1x32xf32, #tpu.memory_space<vmem>>, vector<1x32xf32>
      %38 = vector.broadcast %37 : vector<1x32xf32> to vector<16x32xf32>
      %39 = arith.mulf %36, %38 : vector<16x32xf32>
      %c0_23 = arith.constant 0 : index
      %c0_24 = arith.constant 0 : index
      %40 = vector.load %arg7[%c0_23, %c0_24] : memref<1x32xf32, #tpu.memory_space<vmem>>, vector<1x32xf32>
      %41 = vector.broadcast %40 : vector<1x32xf32> to vector<16x32xf32>
      %42 = arith.addf %39, %41 : vector<16x32xf32>
      %43 = arith.truncf %42 : vector<16x32xf32> to vector<16x32xbf16>
      %c0_25 = arith.constant 0 : index
      %c0_26 = arith.constant 0 : index
      %44 = vector.load %arg8[%c0_25, %c0_26] : memref<16x32xbf16, #tpu.memory_space<vmem>>, vector<16x32xbf16>
      tpu.vector_store %arg8[%c0_25, %c0_26], %43 {strides = array<i32>} : memref<16x32xbf16, #tpu.memory_space<vmem>>, vector<16x32xbf16>,
    } else {
    }
    return
  }
  func.func @transform_0(%arg0: i32, %arg1: i32) -> (i32, i32) {
    %c0_i32 = arith.constant 0 : i32
    return %arg0, %arg1 : i32, i32
  }
  func.func @transform_1(%arg0: i32, %arg1: i32) -> (i32, i32) {
    %c0_i32 = arith.constant 0 : i32
    %c0_i32_0 = arith.constant 0 : i32
    return %arg1, %c0_i32 : i32, i32
  }
  func.func @transform_2(%arg0: i32, %arg1: i32) -> (i32, i32) {
    %c0_i32 = arith.constant 0 : i32
    %c0_i32_0 = arith.constant 0 : i32
    %c0_i32_1 = arith.constant 0 : i32
    return %c0_i32, %c0_i32_0 : i32, i32
  }
  func.func @transform_3(%arg0: i32, %arg1: i32) -> (i32, i32) {
    %c0_i32 = arith.constant 0 : i32
    %c0_i32_0 = arith.constant 0 : i32
    return %arg0, %c0_i32 : i32, i32
  }
  func.func @transform_4(%arg0: i32, %arg1: i32) -> (i32, i32) {
    %c0_i32 = arith.constant 0 : i32
    %c0_i32_0 = arith.constant 0 : i32
    %c0_i32_1 = arith.constant 0 : i32
    return %c0_i32, %c0_i32_0 : i32, i32
  }
  func.func @transform_5(%arg0: i32, %arg1: i32) -> (i32, i32) {
    %c0_i32 = arith.constant 0 : i32
    %c0_i32_0 = arith.constant 0 : i32
    %c0_i32_1 = arith.constant 0 : i32
    return %c0_i32, %c0_i32_0 : i32, i32
  }
  func.func @transform_6(%arg0: i32, %arg1: i32) -> (i32, i32) {
    %c0_i32 = arith.constant 0 : i32
    %c0_i32_0 = arith.constant 0 : i32
    return %arg0, %c0_i32 : i32, i32
  }
}

</mosaic_0001>

<llo_original>
// kernel: forward.12
$region0: #{forward.12}
  #allocation0 [shape = 'u32[]', space=smem, size = 0x4, offset = 0x4, fixed_abs, tag = 'smem constant byte address 0x4 - core index']
  #allocation1 [shape = 'u32[144,128]{1,0:T(1,128)}', space=vmem, size = 0x12000, scoped, tag = 'internal scratch']
  #allocation2 [shape = 'f32[8,1]{1,0:T(8,128)}', space=vmem, size = 0x1000, scoped, tag = 'scratch operand']
  #allocation3 [shape = 'f32[8,1]{1,0:T(8,128)}', space=vmem, size = 0x1000, scoped, tag = 'scratch operand']
  #allocation4 [shape = 'f32[8,8]{1,0:T(8,128)}', space=vmem, size = 0x1000, scoped, tag = 'scratch operand']
  %s0 = inlined_call_operand.vmem [shape: bf16[8,8,8], index: 0, kind: input, shape index: {}]
  %s1 = inlined_call_operand.vmem [shape: bf16[8,8,8], index: 1, kind: input, shape index: {}]
  %s2 = inlined_call_operand.vmem [shape: bf16[8,8,8], index: 2, kind: input, shape index: {}]
  %s3 = inlined_call_operand.vmem [shape: bf16[8,8,8], index: 3, kind: output, shape index: {}]
  %s4 = sld [smem:[#allocation0]]
  $region57: #{forward.12} parent=0
    _
  %s6 = ssub.s32 1, %s4
  %s7 = scalar_select 0, %s6, %s4
  loop: start=0, step=1, limit=10
  $region2: #{forward.12} parent=0 // loop_pre_header
    _
  $region3: #{forward.12} parent=0 // loop_header
    %s9 = sphi 0, %s13
    %p10 = scmp.ge.s32.totalorder %s9, 10
    %s16 = sphi 0, %s35
    %s17 = sphi 0, %s31
    %s18 = sphi 0, %s27
    %s19 = sphi 0, %s16
    %s20 = sphi 0, %s17
    %s21 = sphi 0, %s18
    %s22 = sphi 0, %s19
    %s23 = sphi 0, %s20
    %s24 = sphi 0, %s21
    %s40 = sphi 0, %s42
    %s43 = sphi 0, %s40
    %s44 = sphi 0, %s43
    %s60 = sphi 0, %s44
    %s68 = sphi 0, %s70
    %s71 = sphi 0, %s68
    %s72 = sphi 0, %s71
    %s88 = sphi 0, %s72
    %s96 = sphi 0, %s98
    %s99 = sphi 0, %s96
    %s100 = sphi 0, %s99
    %s116 = sphi 0, %s100
    %s124 = sphi 0, %s126
    %s127 = sphi 0, %s124
    %s128 = sphi 0, %s127
    %s144 = sphi 0, %s128
  $region4: #{forward.12} parent=0 // loop_header_branch
    %12 = sbr.rel (%p10) target = $region8
  $region5: #{forward.12} parent=0 // loop_body
    %s14 = ssub.s32 %s9, 1
    %s15 = ssub.s32 %s9, 2
    %s25 = sadd.s32 1, %s18
    %p26 = scmp.ge.s32.totalorder %s25, 1
    %s27 = scalar_select %p26, 0, %s25
    %s28 = sadd.s32 1, %s17
    %s29 = scalar_select %p26, %s28, %s17
    %p30 = scmp.ge.s32.totalorder %s29, 1
    %s31 = scalar_select %p30, 0, %s29
    %s32 = sadd.s32 1, %s16
    %s33 = scalar_select %p30, %s32, %s16
    %p34 = scmp.ge.s32.totalorder %s33, 8
    %s35 = scalar_select %p34, 0, %s33
    %s36 = ssub.s32 %s16, %s35
    %s37 = ssub.s32 %s17, %s31
    %s38 = sor.u32 %s36, %s37
    %p39 = scmp.eq.s32.totalorder %s38, 0
    %s41 = sadd.s32 %s40, 1
    %s42 = scalar_select %p39, %s40, %s41
    %p45 = pneg %p39
    %p46 = scmp.eq.s32.totalorder %s9, 7
    %p47 = por %p45, %p46
    %p48 = scmp.ne.s32.totalorder %s40, %s43
    %p49 = scmp.eq.s32.totalorder %s9, 0
    %p50 = por %p48, %p49
    %p51 = scmp.ne.s32.totalorder %s40, %s43
    %p52 = scmp.eq.s32.totalorder %s14, 7
    %p53 = por %p51, %p52
    %p54 = scmp.ne.s32.totalorder %s43, %s44
    %p55 = scmp.eq.s32.totalorder %s14, 0
    %p56 = por %p54, %p55
    %p57 = scmp.ne.s32.totalorder %s43, %s44
    %p58 = scmp.eq.s32.totalorder %s15, 7
    %p59 = por %p57, %p58
    %p61 = scmp.ne.s32.totalorder %s44, %s60
    %p62 = scmp.eq.s32.totalorder %s15, 0
    %p63 = por %p61, %p62
    %s64 = ssub.s32 %s16, %s35
    %s65 = ssub.s32 %s18, %s27
    %s66 = sor.u32 %s64, %s65
    %p67 = scmp.eq.s32.totalorder %s66, 0
    %s69 = sadd.s32 %s68, 1
    %s70 = scalar_select %p67, %s68, %s69
    %p73 = pneg %p67
    %p74 = scmp.eq.s32.totalorder %s9, 7
    %p75 = por %p73, %p74
    %p76 = scmp.ne.s32.totalorder %s68, %s71
    %p77 = scmp.eq.s32.totalorder %s9, 0
    %p78 = por %p76, %p77
    %p79 = scmp.ne.s32.totalorder %s68, %s71
    %p80 = scmp.eq.s32.totalorder %s14, 7
    %p81 = por %p79, %p80
    %p82 = scmp.ne.s32.totalorder %s71, %s72
    %p83 = scmp.eq.s32.totalorder %s14, 0
    %p84 = por %p82, %p83
    %p85 = scmp.ne.s32.totalorder %s71, %s72
    %p86 = scmp.eq.s32.totalorder %s15, 7
    %p87 = por %p85, %p86
    %p89 = scmp.ne.s32.totalorder %s72, %s88
    %p90 = scmp.eq.s32.totalorder %s15, 0
    %p91 = por %p89, %p90
    %s92 = ssub.s32 %s16, %s35
    %s93 = ssub.s32 %s18, %s27
    %s94 = sor.u32 %s92, %s93
    %p95 = scmp.eq.s32.totalorder %s94, 0
    %s97 = sadd.s32 %s96, 1
    %s98 = scalar_select %p95, %s96, %s97
    %p101 = pneg %p95
    %p102 = scmp.eq.s32.totalorder %s9, 7
    %p103 = por %p101, %p102
    %p104 = scmp.ne.s32.totalorder %s96, %s99
    %p105 = scmp.eq.s32.totalorder %s9, 0
    %p106 = por %p104, %p105
    %p107 = scmp.ne.s32.totalorder %s96, %s99
    %p108 = scmp.eq.s32.totalorder %s14, 7
    %p109 = por %p107, %p108
    %p110 = scmp.ne.s32.totalorder %s99, %s100
    %p111 = scmp.eq.s32.totalorder %s14, 0
    %p112 = por %p110, %p111
    %p113 = scmp.ne.s32.totalorder %s99, %s100
    %p114 = scmp.eq.s32.totalorder %s15, 7
    %p115 = por %p113, %p114
    %p117 = scmp.ne.s32.totalorder %s100, %s116
    %p118 = scmp.eq.s32.totalorder %s15, 0
    %p119 = por %p117, %p118
    %s120 = ssub.s32 %s16, %s35
    %s121 = ssub.s32 %s17, %s31
    %s122 = sor.u32 %s120, %s121
    %p123 = scmp.eq.s32.totalorder %s122, 0
    %s125 = sadd.s32 %s124, 1
    %s126 = scalar_select %p123, %s124, %s125
    %p129 = pneg %p123
    %p130 = scmp.eq.s32.totalorder %s9, 7
    %p131 = por %p129, %p130
    %p132 = scmp.ne.s32.totalorder %s124, %s127
    %p133 = scmp.eq.s32.totalorder %s9, 0
    %p134 = por %p132, %p133
    %p135 = scmp.ne.s32.totalorder %s124, %s127
    %p136 = scmp.eq.s32.totalorder %s14, 7
    %p137 = por %p135, %p136
    %p138 = scmp.ne.s32.totalorder %s127, %s128
    %p139 = scmp.eq.s32.totalorder %s14, 0
    %p140 = por %p138, %p139
    %p141 = scmp.ne.s32.totalorder %s127, %s128
    %p142 = scmp.eq.s32.totalorder %s15, 7
    %p143 = por %p141, %p142
    %p145 = scmp.ne.s32.totalorder %s128, %s144
    %p146 = scmp.eq.s32.totalorder %s15, 0
    %p147 = por %p145, %p146
    %p148 = scmp.le.s32.totalorder 1, %s9
    %p149 = scmp.lt.s32.totalorder %s9, 9
    %p150 = pnand %p148, %p149
    %p151 = pneg %p150
    // Predicated region
    $region9: #{forward.12} parent=5 // pred_check
      _
    $region10: #{forward.12} parent=5 // pred_check_branch
      %153 = sbr.rel (%p150) target = $region12
    $region11: #{forward.12} parent=5 // pred_region
      %s154 = ssub.s32 %s9, 1
    $region12: #{forward.12} parent=5 // pred_fallthru
      _
    %p155 = scmp.lt.s32.totalorder %s9, 8
    // Predicated region
    $region13: #{forward.12} parent=5 // pred_check
      %p156 = pneg %p155
    $region14: #{forward.12} parent=5 // pred_check_branch
      %158 = sbr.rel (%p156) target = $region16
    $region15: #{forward.12} parent=5 // pred_region
      // Predicated region
      $region17: #{forward.12} parent=15 // pred_check
        %p159 = pneg %p50
      $region18: #{forward.12} parent=15 // pred_check_branch
        %161 = sbr.rel (%p159) target = $region20
      $region19: #{forward.12} parent=15 // pred_region
        %p162 = scmp.lt.s32.totalorder %s16, 7
        %s163 = scalar_select %p162, %s16, 7
        %p164 = scmp.lt.s32.totalorder %s17, 0
        %s165 = scalar_select %p164, %s17, 0
        %s166 = sadd.s32 %s165, %s163
        %s167 = smul.addr %s166, 4
        %s168 = scalar_lea.vmem %s0, %s167
      $region20: #{forward.12} parent=15 // pred_fallthru
        _
      // Predicated region
      $region21: #{forward.12} parent=15 // pred_check
        %p169 = pneg %p78
      $region22: #{forward.12} parent=15 // pred_check_branch
        %171 = sbr.rel (%p169) target = $region24
      $region23: #{forward.12} parent=15 // pred_region
        %p172 = scmp.lt.s32.totalorder %s16, 7
        %s173 = scalar_select %p172, %s16, 7
        %p174 = scmp.lt.s32.totalorder %s18, 0
        %s175 = scalar_select %p174, %s18, 0
        %s176 = sadd.s32 %s175, %s173
        %s177 = smul.addr %s176, 4
        %s178 = scalar_lea.vmem %s1, %s177
      $region24: #{forward.12} parent=15 // pred_fallthru
        _
      // Predicated region
      $region25: #{forward.12} parent=15 // pred_check
        %p179 = pneg %p106
      $region26: #{forward.12} parent=15 // pred_check_branch
        %181 = sbr.rel (%p179) target = $region28
      $region27: #{forward.12} parent=15 // pred_region
        %p182 = scmp.lt.s32.totalorder %s16, 7
        %s183 = scalar_select %p182, %s16, 7
        %p184 = scmp.lt.s32.totalorder %s18, 0
        %s185 = scalar_select %p184, %s18, 0
        %s186 = sadd.s32 %s185, %s183
        %s187 = smul.addr %s186, 4
        %s188 = scalar_lea.vmem %s2, %s187
      $region28: #{forward.12} parent=15 // pred_fallthru
        _
    $region16: #{forward.12} parent=5 // pred_fallthru
      _
    %p189 = scmp.le.s32.totalorder 1, %s9
    %p190 = scmp.lt.s32.totalorder %s9, 9
    %p191 = pnand %p189, %p190
    %p192 = pneg %p191
    // Predicated region
    $region29: #{forward.12} parent=5 // pred_check
      _
    $region30: #{forward.12} parent=5 // pred_check_branch
      %194 = sbr.rel (%p191) target = $region32
    $region31: #{forward.12} parent=5 // pred_region
      %s195 = ssub.s32 %s9, 1
      %p196 = scmp.lt.s32.totalorder %s19, 7
      %s197 = scalar_select %p196, %s19, 7
      %p198 = scmp.lt.s32.totalorder %s20, 0
      %s199 = scalar_select %p198, %s20, 0
      %s200 = sadd.s32 %s199, %s197
      %s201 = smul.addr %s200, 4
      %s202 = scalar_lea.vmem %s0, %s201
      %p203 = pneg %p56
      %p204 = pneg %p53
      %p205 = scmp.lt.s32.totalorder %s19, 7
      %s206 = scalar_select %p205, %s19, 7
      %p207 = scmp.lt.s32.totalorder %s21, 0
      %s208 = scalar_select %p207, %s21, 0
      %s209 = sadd.s32 %s208, %s206
      %s210 = smul.addr %s209, 4
      %s211 = scalar_lea.vmem %s1, %s210
      %p212 = pneg %p84
      %p213 = pneg %p81
      %p214 = scmp.lt.s32.totalorder %s19, 7
      %s215 = scalar_select %p214, %s19, 7
      %p216 = scmp.lt.s32.totalorder %s21, 0
      %s217 = scalar_select %p216, %s21, 0
      %s218 = sadd.s32 %s217, %s215
      %s219 = smul.addr %s218, 4
      %s220 = scalar_lea.vmem %s2, %s219
      %p221 = pneg %p112
      %p222 = pneg %p109
      %p223 = pneg %p140
      %p224 = pneg %p137
      %p225 = scmp.lt.s32.totalorder %s19, 7
      %s226 = scalar_select %p225, %s19, 7
      %p227 = scmp.lt.s32.totalorder %s20, 0
      %s228 = scalar_select %p227, %s20, 0
      %s229 = sadd.s32 %s228, %s226
      %s230 = smul.addr %s229, 4
      %s231 = scalar_lea.vmem %s3, %s230
      %p232 = scmp.lt.s32.totalorder %s19, 7
      %s233 = scalar_select %p232, %s19, 7
      %p234 = scmp.lt.s32.totalorder %s20, 0
      %s235 = scalar_select %p234, %s20, 0
      %s236 = sadd.s32 %s235, %s233
      %s237 = smul.addr %s236, 4
      %s238 = scalar_lea.vmem %s0, %s237
      %p239 = scmp.lt.s32.totalorder %s19, 7
      %s240 = scalar_select %p239, %s19, 7
      %p241 = scmp.lt.s32.totalorder %s21, 0
      %s242 = scalar_select %p241, %s21, 0
      %s243 = sadd.s32 %s242, %s240
      %s244 = smul.addr %s243, 4
      %s245 = scalar_lea.vmem %s1, %s244
      %p246 = scmp.lt.s32.totalorder %s19, 7
      %s247 = scalar_select %p246, %s19, 7
      %p248 = scmp.lt.s32.totalorder %s21, 0
      %s249 = scalar_select %p248, %s21, 0
      %s250 = sadd.s32 %s249, %s247
      %s251 = smul.addr %s250, 4
      %s252 = scalar_lea.vmem %s2, %s251
      %p253 = scmp.lt.s32.totalorder %s19, 7
      %s254 = scalar_select %p253, %s19, 7
      %p255 = scmp.lt.s32.totalorder %s20, 0
      %s256 = scalar_select %p255, %s20, 0
      %s257 = sadd.s32 %s256, %s254
      %s258 = smul.addr %s257, 4
      %s259 = scalar_lea.vmem %s3, %s258
      %p261 = scmp.eq.s32.totalorder %s21, 0
      // Predicated region
      $region33: #{forward.12} parent=31 // pred_check
        %p262 = pneg %p261
      $region34: #{forward.12} parent=31 // pred_check_branch
        %264 = sbr.rel (%p262) target = $region36
      $region35: #{forward.12} parent=31 // pred_region
        %vm265 = vcmask 7168
        %266 = vst.msk [vmem:[#allocation2] sm:$0xff] %vm265, -1e+30
        %267 = vst.msk [vmem:[#allocation3] sm:$0xff] %vm265, 0.0
        %vm268 = vcmask 64512
        %269 = vst.msk [vmem:[#allocation4] sm:$0xff] %vm268, 0.0
      $region36: #{forward.12} parent=31 // pred_fallthru
        _
      %s270 = smul.u32 %s20, 8
      %s271 = smul.u32 %s21, 8
      %s272 = sadd.s32 %s270, 7
      %p273 = scmp.le.s32.totalorder %s271, %s272
      // Predicated region
      $region37: #{forward.12} parent=31 // pred_check
        %p274 = pneg %p273
      $region38: #{forward.12} parent=31 // pred_check_branch
        %276 = sbr.rel (%p274) target = $region40
      $region39: #{forward.12} parent=31 // pred_region
        %v277 = vld [vmem:[%s238] sm:$0xf]
        %v278 = vld [vmem:[%s245] sm:$0xf]
        %vm279 = vcmask 64512
        %v281 = vsel %vm279, %v277, 0
        %v284 = vsel %vm279, %v278, 0
        %286 = vmatprep.subr.bf16.mxu0 0
        %287 = vmatpush1.bf16.xpose.msra.mxu0 %v284
        %288 = vmatprep.subr.bf16.mxu0 0
        %289 = vmatpush1.bf16.xpose.msra.mxu0 0
        %290 = vmatprep.subr.bf16.mxu0 0
        %291 = vmatpush1.bf16.xpose.msra.mxu0 0
        %292 = vmatprep.subr.bf16.mxu0 0
        %293 = vmatpush1.bf16.xpose.msra.mxu0 0
        %294 = vmatprep.subr.bf16.mxu0 0
        %295 = vmatpush1.bf16.xpose.msra.mxu0 0
        %296 = vmatprep.subr.bf16.mxu0 0
        %297 = vmatpush1.bf16.xpose.msra.mxu0 0
        %298 = vmatprep.subr.bf16.mxu0 0
        %299 = vmatpush1.bf16.xpose.msra.mxu0 0
        %300 = vmatprep.subr.bf16.mxu0 0
        %301 = vmatpush1.bf16.xpose.msra.mxu0 0
        %302 = vmatprep.subr.bf16.mxu0 0
        %303 = vmatpush1.bf16.xpose.msra.mxu0 0
        %304 = vmatprep.subr.bf16.mxu0 0
        %305 = vmatpush1.bf16.xpose.msra.mxu0 0
        %306 = vmatprep.subr.bf16.mxu0 0
        %307 = vmatpush1.bf16.xpose.msra.mxu0 0
        %308 = vmatprep.subr.bf16.mxu0 0
        %309 = vmatpush1.bf16.xpose.msra.mxu0 0
        %310 = vmatprep.subr.bf16.mxu0 0
        %311 = vmatpush1.bf16.xpose.msra.mxu0 0
        %312 = vmatprep.subr.bf16.mxu0 0
        %313 = vmatpush1.bf16.xpose.msra.mxu0 0
        %314 = vmatprep.subr.bf16.mxu0 0
        %315 = vmatpush1.bf16.xpose.msra.mxu0 0
        %316 = vmatprep.subr.bf16.mxu0 0
        %317 = vmatpush1.bf16.xpose.msra.mxu0 0
        %318 = vmatprep.mubr.bf16.mxu0 0
        %319 = vmatmul.mubr.bf16.gmra.mrb[0].mxu0 %v281
        %v320 = vpop.f32.mrb[0].mxu0
        %v321 = vadd.f32 0.0, %v320
        %v322 = vpop.f32.mrb[0].mxu0
        %v323 = vpop.f32.mrb[0].mxu0
        %v324 = vpop.f32.mrb[0].mxu0
        %325 = vdwg.mxu0
        %v326 = vlaneseq
        %v327 = vshrl.u32 %v326, 7
        %v328 = vstv %s270
        %v329 = vadd.s32 %v328, %v327
        %v330 = vlaneseq
        %v331 = vand.u32 %v330, 127
        %v332 = vstv %s271
        %v333 = vadd.s32 %v332, %v331
        %vm334 = vcmp.gt.s32.totalorder %v333, %v329
        %v335 = vsel %vm334, -1e+30, %v321
        %v336 = vld [vmem:[#allocation2] sm:$0xff]
        %v337 = vsel %vm279, %v335, -inf
        %338 = vmax.xlane.f32.xlu0 %v337
        %v339 = vpop.xlane.xlu0 %338
        %v340 = vmax.f32 %v336, %v339
        %v341 = vsub.f32 %v336, %v340
        %v342 = vmul.f32 %v341, 1.442695
        %v343 = vpow.pop %v342
        %345 = vset.pattern.permute.xlu0 0
        %346 = vperm.xlu0 %345, %v340
        %v347 = vpop.permute.xlu0 %346
        %v349 = vsub.f32 %v335, %v347
        %v350 = vmul.f32 %v349, 1.442695
        %v351 = vpow.pop %v350
        %v352 = vld [vmem:[#allocation3] sm:$0xff]
        %v353 = vmul.f32 %v343, %v352
        %v354 = vsel %vm279, %v351, 0.0
        %355 = vadd.xlane.f32.xlu0 %v354
        %v356 = vpop.xlane.xlu0 %355
        %v357 = vadd.f32 %v353, %v356
        %vm358 = vcmask 7168
        %359 = vst.msk [vmem:[#allocation3] sm:$0xff] %vm358, %v357
        %v360 = vld [vmem:[#allocation4] sm:$0xff]
        %362 = vset.pattern.permute.xlu0 0
        %363 = vperm.xlu0 %362, %v343
        %v364 = vpop.permute.xlu0 %363
        %v366 = vmul.f32 %v364, %v360
        %v367 = vpack.c.bf16 %v351, %v351
        %v368 = vld [vmem:[%s252] sm:$0xf]
        %v370 = vsel %vm279, %v367, 0
        %vm372 = vcmask 1043456
        %v374 = vsel %vm372, %v368, 0
        %376 = vmatprep.subr.bf16.mxu0 0
        %377 = vmatpush1.bf16.msra.mxu0 %v374
        %378 = vmatprep.subr.bf16.mxu0 0
        %379 = vmatpush1.bf16.msra.mxu0 0
        %380 = vmatprep.subr.bf16.mxu0 0
        %381 = vmatpush1.bf16.msra.mxu0 0
        %382 = vmatprep.subr.bf16.mxu0 0
        %383 = vmatpush1.bf16.msra.mxu0 0
        %384 = vmatprep.subr.bf16.mxu0 0
        %385 = vmatpush1.bf16.msra.mxu0 0
        %386 = vmatprep.subr.bf16.mxu0 0
        %387 = vmatpush1.bf16.msra.mxu0 0
        %388 = vmatprep.subr.bf16.mxu0 0
        %389 = vmatpush1.bf16.msra.mxu0 0
        %390 = vmatprep.subr.bf16.mxu0 0
        %391 = vmatpush1.bf16.msra.mxu0 0
        %392 = vmatprep.subr.bf16.mxu0 0
        %393 = vmatpush1.bf16.msra.mxu0 0
        %394 = vmatprep.subr.bf16.mxu0 0
        %395 = vmatpush1.bf16.msra.mxu0 0
        %396 = vmatprep.subr.bf16.mxu0 0
        %397 = vmatpush1.bf16.msra.mxu0 0
        %398 = vmatprep.subr.bf16.mxu0 0
        %399 = vmatpush1.bf16.msra.mxu0 0
        %400 = vmatprep.subr.bf16.mxu0 0
        %401 = vmatpush1.bf16.msra.mxu0 0
        %402 = vmatprep.subr.bf16.mxu0 0
        %403 = vmatpush1.bf16.msra.mxu0 0
        %404 = vmatprep.subr.bf16.mxu0 0
        %405 = vmatpush1.bf16.msra.mxu0 0
        %406 = vmatprep.subr.bf16.mxu0 0
        %407 = vmatpush1.bf16.msra.mxu0 0
        %408 = vmatprep.mubr.bf16.mxu0 0
        %409 = vmatmul.mubr.bf16.gmra.mrb[0].mxu0 %v370
        %v410 = vpop.f32.mrb[0].mxu0
        %v411 = vadd.f32 0.0, %v410
        %v412 = vpop.f32.mrb[0].mxu0
        %v413 = vpop.f32.mrb[0].mxu0
        %v414 = vpop.f32.mrb[0].mxu0
        %415 = vdwg.mxu0
        %v416 = vadd.f32 %v366, %v411
        %417 = vst.msk [vmem:[#allocation4] sm:$0xff] %vm279, %v416
        %418 = vst.msk [vmem:[#allocation2] sm:$0xff] %vm358, %v340
      $region40: #{forward.12} parent=31 // pred_fallthru
        _
      // Predicated region
      $region41: #{forward.12} parent=31 // pred_check
        %p419 = pneg %p261
      $region42: #{forward.12} parent=31 // pred_check_branch
        %421 = sbr.rel (%p419) target = $region44
      $region43: #{forward.12} parent=31 // pred_region
        %v422 = vld [vmem:[#allocation4] sm:$0xff]
        %v423 = vld [vmem:[#allocation3] sm:$0xff]
        %v424 = vrcp.pop %v423
        %426 = vset.pattern.permute.xlu0 0
        %427 = vperm.xlu0 %426, %v424
        %v428 = vpop.permute.xlu0 %427
        %v430 = vmul.f32 %v422, %v428
        %v431 = vpack.c.bf16 %v430, %v430
        %vm432 = vcmask 60416
        %433 = vst.msk [vmem:[%s259] sm:$0xf] %vm432, %v431
      $region44: #{forward.12} parent=31 // pred_fallthru
        _
      %p434 = scmp.lt.s32.totalorder %s19, 7
      %s435 = scalar_select %p434, %s19, 7
      %p436 = scmp.lt.s32.totalorder %s20, 0
      %s437 = scalar_select %p436, %s20, 0
      %s438 = sadd.s32 %s437, %s435
      %s439 = smul.addr %s438, 4
      %s440 = scalar_lea.vmem %s3, %s439
      // Predicated region
      $region45: #{forward.12} parent=31 // pred_check
        %p441 = pneg %p137
      $region46: #{forward.12} parent=31 // pred_check_branch
        %443 = sbr.rel (%p441) target = $region48
      $region47: #{forward.12} parent=31 // pred_region
        _
      $region48: #{forward.12} parent=31 // pred_fallthru
        _
    $region32: #{forward.12} parent=5 // pred_fallthru
      _
    %p444 = scmp.le.s32.totalorder 2, %s9
    // Predicated region
    $region49: #{forward.12} parent=5 // pred_check
      %p445 = pneg %p444
    $region50: #{forward.12} parent=5 // pred_check_branch
      %447 = sbr.rel (%p445) target = $region52
    $region51: #{forward.12} parent=5 // pred_region
      %s448 = ssub.s32 %s9, 2
      // Predicated region
      $region53: #{forward.12} parent=51 // pred_check
        %p449 = pneg %p143
      $region54: #{forward.12} parent=51 // pred_check_branch
        %451 = sbr.rel (%p449) target = $region56
      $region55: #{forward.12} parent=51 // pred_region
        %p452 = scmp.lt.s32.totalorder %s22, 7
        %s453 = scalar_select %p452, %s22, 7
        %p454 = scmp.lt.s32.totalorder %s23, 0
        %s455 = scalar_select %p454, %s23, 0
        %s456 = sadd.s32 %s455, %s453
        %s457 = smul.addr %s456, 4
        %s458 = scalar_lea.vmem %s3, %s457
      $region56: #{forward.12} parent=51 // pred_fallthru
        _
    $region52: #{forward.12} parent=5 // pred_fallthru
      _
  $region6: #{forward.12} parent=0 // loop_footer
    %s13 = sadd.s32 1, %s9
  $region7: #{forward.12} parent=0 // loop_footer_branch
    %8 = sbr.rel target = $region3
  $region8: #{forward.12} parent=0 // loop_exit
    _

// kernel: forward.14
$region0: #{forward.14}
  #allocation0 [shape = 'u32[]', space=smem, size = 0x4, offset = 0x4, fixed_abs, tag = 'smem constant byte address 0x4 - core index']
  #allocation1 [shape = 'u32[144,128]{1,0:T(1,128)}', space=vmem, size = 0x12000, scoped, tag = 'internal scratch']
  #allocation2 [shape = 'f32[16,64]{1,0:T(8,128)}', space=vmem, size = 0x2000, scoped, tag = 'scratch operand']
  %s0 = inlined_call_operand.vmem [shape: bf16[16,32], index: 0, kind: input, shape index: {}]
  %s1 = inlined_call_operand.vmem [shape: bf16[32,64], index: 1, kind: input, shape index: {}]
  %s2 = inlined_call_operand.vmem [shape: f32[1,64], index: 2, kind: input, shape index: {}]
  %s3 = inlined_call_operand.vmem [shape: bf16[16,64], index: 3, kind: output, shape index: {}]
  %s4 = sld [smem:[#allocation0]]
  $region30: #{forward.14} parent=0
    _
  %s6 = ssub.s32 1, %s4
  %s7 = scalar_select 0, %s6, %s4
  // Predicated region
  $region2: #{forward.14} parent=0 // pred_check
    _
  $region3: #{forward.14} parent=0 // pred_check_branch
    %9 = sbr.rel (0) target = $region5
  $region4: #{forward.14} parent=0 // pred_region
    _
  $region5: #{forward.14} parent=0 // pred_fallthru
    _
  // Predicated region
  $region6: #{forward.14} parent=0 // pred_check
    _
  $region7: #{forward.14} parent=0 // pred_check_branch
    %11 = sbr.rel (0) target = $region9
  $region8: #{forward.14} parent=0 // pred_region
    _
  $region9: #{forward.14} parent=0 // pred_fallthru
    _
  // Predicated region
  $region10: #{forward.14} parent=0 // pred_check
    _
  $region11: #{forward.14} parent=0 // pred_check_branch
    %13 = sbr.rel (0) target = $region13
  $region12: #{forward.14} parent=0 // pred_region
    _
  $region13: #{forward.14} parent=0 // pred_fallthru
    _
  %p15 = scmp.eq.s32.totalorder 0, 0
  // Predicated region
  $region14: #{forward.14} parent=0 // pred_check
    %p16 = pneg %p15
  $region15: #{forward.14} parent=0 // pred_check_branch
    %18 = sbr.rel (%p16) target = $region17
  $region16: #{forward.14} parent=0 // pred_region
    %vm19 = vcmask 523264
    %20 = vst.msk [vmem:[#allocation2] sm:$0xff] %vm19, 0.0
    %21 = vst.msk [vmem:[#allocation2 + $0x8] sm:$0xff] %vm19, 0.0
  $region17: #{forward.14} parent=0 // pred_fallthru
    _
  %v22 = vld [vmem:[#allocation2] sm:$0xff]
  %v23 = vld [vmem:[#allocation2 + $0x8] sm:$0xff]
  %v24 = vld [vmem:[%s0] sm:$0xf]
  %v25 = vld [vmem:[%s0 + $0x4] sm:$0xf]
  %v26 = vld [vmem:[%s1] sm:$0xf]
  %v27 = vld [vmem:[%s1 + $0x4] sm:$0xf]
  %v28 = vld [vmem:[%s1 + $0x8] sm:$0xf]
  %v29 = vld [vmem:[%s1 + $0xc] sm:$0xf]
  %v32 = vunpack.c.l.b16 %v24
  %v33 = vunpack.c.l.b16 %v25
  %v34 = vpack.c.b16 %v33, %v32
  %v39 = vunpack.c.l.b16 %v26
  %v40 = vunpack.c.l.b16 %v27
  %v41 = vunpack.c.l.b16 %v28
  %v42 = vunpack.c.l.b16 %v29
  %v43 = vpack.c.b16 %v40, %v39
  %v44 = vpack.c.b16 %v42, %v41
  %vm47 = vcmask 261120
  %v49 = vsel %vm47, %v34, 0
  %51 = vmatprep.subr.bf16.mxu0 0
  %52 = vmatpush1.bf16.msra.mxu0 %v43
  %53 = vmatprep.subr.bf16.mxu0 0
  %54 = vmatpush1.bf16.msra.mxu0 %v44
  %55 = vmatprep.subr.bf16.mxu0 0
  %56 = vmatpush1.bf16.msra.mxu0 0
  %57 = vmatprep.subr.bf16.mxu0 0
  %58 = vmatpush1.bf16.msra.mxu0 0
  %59 = vmatprep.subr.bf16.mxu0 0
  %60 = vmatpush1.bf16.msra.mxu0 0
  %61 = vmatprep.subr.bf16.mxu0 0
  %62 = vmatpush1.bf16.msra.mxu0 0
  %63 = vmatprep.subr.bf16.mxu0 0
  %64 = vmatpush1.bf16.msra.mxu0 0
  %65 = vmatprep.subr.bf16.mxu0 0
  %66 = vmatpush1.bf16.msra.mxu0 0
  %67 = vmatprep.subr.bf16.mxu0 0
  %68 = vmatpush1.bf16.msra.mxu0 0
  %69 = vmatprep.subr.bf16.mxu0 0
  %70 = vmatpush1.bf16.msra.mxu0 0
  %71 = vmatprep.subr.bf16.mxu0 0
  %72 = vmatpush1.bf16.msra.mxu0 0
  %73 = vmatprep.subr.bf16.mxu0 0
  %74 = vmatpush1.bf16.msra.mxu0 0
  %75 = vmatprep.subr.bf16.mxu0 0
  %76 = vmatpush1.bf16.msra.mxu0 0
  %77 = vmatprep.subr.bf16.mxu0 0
  %78 = vmatpush1.bf16.msra.mxu0 0
  %79 = vmatprep.subr.bf16.mxu0 0
  %80 = vmatpush1.bf16.msra.mxu0 0
  %81 = vmatprep.subr.bf16.mxu0 0
  %82 = vmatpush1.bf16.msra.mxu0 0
  %83 = vmatprep.mubr.bf16.mxu0 0
  %84 = vmatmul.mubr.bf16.gmra.mrb[0].mxu0 %v49
  %v85 = vpop.f32.mrb[0].mxu0
  %v86 = vadd.f32 0.0, %v85
  %v87 = vpop.f32.mrb[0].mxu0
  %v88 = vpop.f32.mrb[0].mxu0
  %v89 = vadd.f32 0.0, %v88
  %v90 = vpop.f32.mrb[0].mxu0
  %91 = vdwg.mxu0
  %v92 = vadd.f32 %v22, %v86
  %v93 = vadd.f32 %v23, %v89
  %vm94 = vcmask 523264
  %95 = vst.msk [vmem:[#allocation2] sm:$0xff] %vm94, %v92
  %96 = vst.msk [vmem:[#allocation2 + $0x8] sm:$0xff] %vm94, %v93
  // Predicated region
  $region18: #{forward.14} parent=0 // pred_check
    %p97 = pneg %p15
  $region19: #{forward.14} parent=0 // pred_check_branch
    %99 = sbr.rel (%p97) target = $region21
  $region20: #{forward.14} parent=0 // pred_region
    %v100 = vld [vmem:[#allocation2] sm:$0xff]
    %v101 = vld [vmem:[#allocation2 + $0x8] sm:$0xff]
    %v102 = vld [vmem:[%s2] sm:$0x1]
    %v104 = vlaneseq
    %v105 = vshrl.u32 %v104, 7
    %v106 = vsub.s32 0, %v105
    %v107 = vrot.slane %v102, %v106
    %v109 = vadd.f32 %v100, %v107
    %v110 = vadd.f32 %v101, %v107
    %v111 = vmul.f32 %v109, 0.5
    %v112 = vmul.f32 %v110, 0.5
    %v113 = vmul.f32 %v109, 0.70710677
    %v114 = vmul.f32 %v110, 0.70710677
    %v115 = verf.f32.pop %v113
    %v116 = verf.f32.pop %v114
    %v117 = vadd.f32 %v115, 1.0
    %v118 = vadd.f32 %v116, 1.0
    %v119 = vmul.f32 %v111, %v117
    %v120 = vmul.f32 %v112, %v118
    %v121 = vpack.c.bf16 %v120, %v119
    %v123 = vunpack.c.l.b16 %v121
    %v124 = vunpack.c.h.b16 %v121
    %v125 = vpack.c.b16 %v123, %v123
    %v126 = vpack.c.b16 %v124, %v124
    %vm129 = vcmask 519168
    %130 = vst.msk [vmem:[%s3] sm:$0xf] %vm129, %v125
    %131 = vst.msk [vmem:[%s3 + $0x4] sm:$0xf] %vm129, %v126
  $region21: #{forward.14} parent=0 // pred_fallthru
    _
  // Predicated region
  $region22: #{forward.14} parent=0 // pred_check
    _
  $region23: #{forward.14} parent=0 // pred_check_branch
    %133 = sbr.rel (0) target = $region25
  $region24: #{forward.14} parent=0 // pred_region
    _
  $region25: #{forward.14} parent=0 // pred_fallthru
    _
  // Predicated region
  $region26: #{forward.14} parent=0 // pred_check
    _
  $region27: #{forward.14} parent=0 // pred_check_branch
    %135 = sbr.rel (0) target = $region29
  $region28: #{forward.14} parent=0 // pred_region
    _
  $region29: #{forward.14} parent=0 // pred_fallthru
    _

// kernel: forward.13
$region0: #{forward.13}
  #allocation0 [shape = 'u32[]', space=smem, size = 0x4, offset = 0x4, fixed_abs, tag = 'smem constant byte address 0x4 - core index']
  #allocation1 [shape = 'u32[144,128]{1,0:T(1,128)}', space=vmem, size = 0x12000, scoped, tag = 'internal scratch']
  #allocation2 [shape = 'f32[16,32]{1,0:T(8,128)}', space=vmem, size = 0x2000, scoped, tag = 'scratch operand']
  %s0 = inlined_call_operand.vmem [shape: bf16[16,32], index: 0, kind: input, shape index: {}]
  %s1 = inlined_call_operand.vmem [shape: bf16[32,32], index: 1, kind: input, shape index: {}]
  %s2 = inlined_call_operand.vmem [shape: f32[1,32], index: 2, kind: input, shape index: {}]
  %s3 = inlined_call_operand.vmem [shape: bf16[16,32], index: 3, kind: input, shape index: {}]
  %s4 = inlined_call_operand.vmem [shape: f32[1,32], index: 4, kind: input, shape index: {}]
  %s5 = inlined_call_operand.vmem [shape: f32[1,32], index: 5, kind: input, shape index: {}]
  %s6 = inlined_call_operand.vmem [shape: bf16[16,32], index: 6, kind: output, shape index: {}]
  %s7 = sld [smem:[#allocation0]]
  $region42: #{forward.13} parent=0
    _
  %s9 = ssub.s32 1, %s7
  %s10 = scalar_select 0, %s9, %s7
  // Predicated region
  $region2: #{forward.13} parent=0 // pred_check
    _
  $region3: #{forward.13} parent=0 // pred_check_branch
    %12 = sbr.rel (0) target = $region5
  $region4: #{forward.13} parent=0 // pred_region
    _
  $region5: #{forward.13} parent=0 // pred_fallthru
    _
  // Predicated region
  $region6: #{forward.13} parent=0 // pred_check
    _
  $region7: #{forward.13} parent=0 // pred_check_branch
    %14 = sbr.rel (0) target = $region9
  $region8: #{forward.13} parent=0 // pred_region
    _
  $region9: #{forward.13} parent=0 // pred_fallthru
    _
  // Predicated region
  $region10: #{forward.13} parent=0 // pred_check
    _
  $region11: #{forward.13} parent=0 // pred_check_branch
    %16 = sbr.rel (0) target = $region13
  $region12: #{forward.13} parent=0 // pred_region
    _
  $region13: #{forward.13} parent=0 // pred_fallthru
    _
  // Predicated region
  $region14: #{forward.13} parent=0 // pred_check
    _
  $region15: #{forward.13} parent=0 // pred_check_branch
    %18 = sbr.rel (0) target = $region17
  $region16: #{forward.13} parent=0 // pred_region
    _
  $region17: #{forward.13} parent=0 // pred_fallthru
    _
  // Predicated region
  $region18: #{forward.13} parent=0 // pred_check
    _
  $region19: #{forward.13} parent=0 // pred_check_branch
    %20 = sbr.rel (0) target = $region21
  $region20: #{forward.13} parent=0 // pred_region
    _
  $region21: #{forward.13} parent=0 // pred_fallthru
    _
  // Predicated region
  $region22: #{forward.13} parent=0 // pred_check
    _
  $region23: #{forward.13} parent=0 // pred_check_branch
    %22 = sbr.rel (0) target = $region25
  $region24: #{forward.13} parent=0 // pred_region
    _
  $region25: #{forward.13} parent=0 // pred_fallthru
    _
  %p24 = scmp.eq.s32.totalorder 0, 0
  // Predicated region
  $region26: #{forward.13} parent=0 // pred_check
    %p25 = pneg %p24
  $region27: #{forward.13} parent=0 // pred_check_branch
    %27 = sbr.rel (%p25) target = $region29
  $region28: #{forward.13} parent=0 // pred_region
    %vm28 = vcmask 261120
    %29 = vst.msk [vmem:[#allocation2] sm:$0xff] %vm28, 0.0
    %30 = vst.msk [vmem:[#allocation2 + $0x8] sm:$0xff] %vm28, 0.0
  $region29: #{forward.13} parent=0 // pred_fallthru
    _
  %v31 = vld [vmem:[#allocation2] sm:$0xff]
  %v32 = vld [vmem:[#allocation2 + $0x8] sm:$0xff]
  %v33 = vld [vmem:[%s0] sm:$0xf]
  %v34 = vld [vmem:[%s0 + $0x4] sm:$0xf]
  %v35 = vld [vmem:[%s1] sm:$0xf]
  %v36 = vld [vmem:[%s1 + $0x4] sm:$0xf]
  %v37 = vld [vmem:[%s1 + $0x8] sm:$0xf]
  %v38 = vld [vmem:[%s1 + $0xc] sm:$0xf]
  %v41 = vunpack.c.l.b16 %v33
  %v42 = vunpack.c.l.b16 %v34
  %v43 = vpack.c.b16 %v42, %v41
  %v48 = vunpack.c.l.b16 %v35
  %v49 = vunpack.c.l.b16 %v36
  %v50 = vunpack.c.l.b16 %v37
  %v51 = vunpack.c.l.b16 %v38
  %v52 = vpack.c.b16 %v49, %v48
  %v53 = vpack.c.b16 %v51, %v50
  %vm56 = vcmask 261120
  %v58 = vsel %vm56, %v43, 0
  %60 = vmatprep.subr.bf16.mxu0 0
  %61 = vmatpush1.bf16.msra.mxu0 %v52
  %62 = vmatprep.subr.bf16.mxu0 0
  %63 = vmatpush1.bf16.msra.mxu0 %v53
  %64 = vmatprep.subr.bf16.mxu0 0
  %65 = vmatpush1.bf16.msra.mxu0 0
  %66 = vmatprep.subr.bf16.mxu0 0
  %67 = vmatpush1.bf16.msra.mxu0 0
  %68 = vmatprep.subr.bf16.mxu0 0
  %69 = vmatpush1.bf16.msra.mxu0 0
  %70 = vmatprep.subr.bf16.mxu0 0
  %71 = vmatpush1.bf16.msra.mxu0 0
  %72 = vmatprep.subr.bf16.mxu0 0
  %73 = vmatpush1.bf16.msra.mxu0 0
  %74 = vmatprep.subr.bf16.mxu0 0
  %75 = vmatpush1.bf16.msra.mxu0 0
  %76 = vmatprep.subr.bf16.mxu0 0
  %77 = vmatpush1.bf16.msra.mxu0 0
  %78 = vmatprep.subr.bf16.mxu0 0
  %79 = vmatpush1.bf16.msra.mxu0 0
  %80 = vmatprep.subr.bf16.mxu0 0
  %81 = vmatpush1.bf16.msra.mxu0 0
  %82 = vmatprep.subr.bf16.mxu0 0
  %83 = vmatpush1.bf16.msra.mxu0 0
  %84 = vmatprep.subr.bf16.mxu0 0
  %85 = vmatpush1.bf16.msra.mxu0 0
  %86 = vmatprep.subr.bf16.mxu0 0
  %87 = vmatpush1.bf16.msra.mxu0 0
  %88 = vmatprep.subr.bf16.mxu0 0
  %89 = vmatpush1.bf16.msra.mxu0 0
  %90 = vmatprep.subr.bf16.mxu0 0
  %91 = vmatpush1.bf16.msra.mxu0 0
  %92 = vmatprep.mubr.bf16.mxu0 0
  %93 = vmatmul.mubr.bf16.gmra.mrb[0].mxu0 %v58
  %v94 = vpop.f32.mrb[0].mxu0
  %v95 = vadd.f32 0.0, %v94
  %v96 = vpop.f32.mrb[0].mxu0
  %v97 = vpop.f32.mrb[0].mxu0
  %v98 = vadd.f32 0.0, %v97
  %v99 = vpop.f32.mrb[0].mxu0
  %100 = vdwg.mxu0
  %v101 = vadd.f32 %v31, %v95
  %v102 = vadd.f32 %v32, %v98
  %103 = vst.msk [vmem:[#allocation2] sm:$0xff] %vm56, %v101
  %104 = vst.msk [vmem:[#allocation2 + $0x8] sm:$0xff] %vm56, %v102
  // Predicated region
  $region30: #{forward.13} parent=0 // pred_check
    %p105 = pneg %p24
  $region31: #{forward.13} parent=0 // pred_check_branch
    %107 = sbr.rel (%p105) target = $region33
  $region32: #{forward.13} parent=0 // pred_region
    %v108 = vld [vmem:[#allocation2] sm:$0xff]
    %v109 = vld [vmem:[#allocation2 + $0x8] sm:$0xff]
    %v110 = vld [vmem:[%s2] sm:$0x1]
    %v112 = vlaneseq
    %v113 = vshrl.u32 %v112, 7
    %v114 = vsub.s32 0, %v113
    %v115 = vrot.slane %v110, %v114
    %v117 = vadd.f32 %v108, %v115
    %v118 = vadd.f32 %v109, %v115
    %v119 = vld [vmem:[%s3] sm:$0xf]
    %v120 = vld [vmem:[%s3 + $0x4] sm:$0xf]
    %v121 = vunpack.c.l.bf16 %v119
    %v122 = vunpack.c.l.bf16 %v120
    %v123 = vadd.f32 %v117, %v121
    %v124 = vadd.f32 %v118, %v122
    %v125 = vsel %vm56, %v123, 0.0
    %126 = vadd.xlane.f32.xlu0 %v125
    %v127 = vpop.xlane.xlu0 %126
    %v128 = vsel %vm56, %v124, 0.0
    %129 = vadd.xlane.f32.xlu0 %v128
    %v130 = vpop.xlane.xlu0 %129
    %v131 = vrcp.pop 32.0
    %v132 = vmul.f32 %v127, %v131
    %v133 = vmul.f32 %v130, %v131
    %v134 = vsub.f32 %v123, %v132
    %v135 = vsub.f32 %v124, %v133
    %v136 = vmul.f32 %v134, %v134
    %v137 = vmul.f32 %v135, %v135
    %v138 = vsel %vm56, %v136, 0.0
    %139 = vadd.xlane.f32.xlu0 %v138
    %v140 = vpop.xlane.xlu0 %139
    %v141 = vsel %vm56, %v137, 0.0
    %142 = vadd.xlane.f32.xlu0 %v141
    %v143 = vpop.xlane.xlu0 %142
    %v144 = vmul.f32 %v140, %v131
    %v145 = vmul.f32 %v143, %v131
    %v146 = vadd.f32 %v144, 1e-05
    %v147 = vadd.f32 %v145, 1e-05
    %v148 = vrsqrt.pop %v146
    %v149 = vrsqrt.pop %v147
    %v150 = vmul.f32 %v134, %v148
    %v151 = vmul.f32 %v135, %v149
    %v152 = vld [vmem:[%s4] sm:$0x1]
    %v154 = vlaneseq
    %v155 = vshrl.u32 %v154, 7
    %v156 = vsub.s32 0, %v155
    %v157 = vrot.slane %v152, %v156
    %v159 = vmul.f32 %v150, %v157
    %v160 = vmul.f32 %v151, %v157
    %v161 = vld [vmem:[%s5] sm:$0x1]
    %v163 = vlaneseq
    %v164 = vshrl.u32 %v163, 7
    %v165 = vsub.s32 0, %v164
    %v166 = vrot.slane %v161, %v165
    %v168 = vadd.f32 %v159, %v166
    %v169 = vadd.f32 %v160, %v166
    %v170 = vpack.c.bf16 %v169, %v168
    %v172 = vunpack.c.l.b16 %v170
    %v173 = vunpack.c.h.b16 %v170
    %v174 = vpack.c.b16 %v172, %v172
    %v175 = vpack.c.b16 %v173, %v173
    %vm178 = vcmask 257024
    %179 = vst.msk [vmem:[%s6] sm:$0xf] %vm178, %v174
    %180 = vst.msk [vmem:[%s6 + $0x4] sm:$0xf] %vm178, %v175
  $region33: #{forward.13} parent=0 // pred_fallthru
    _
  // Predicated region
  $region34: #{forward.13} parent=0 // pred_check
    _
  $region35: #{forward.13} parent=0 // pred_check_branch
    %182 = sbr.rel (0) target = $region37
  $region36: #{forward.13} parent=0 // pred_region
    _
  $region37: #{forward.13} parent=0 // pred_fallthru
    _
  // Predicated region
  $region38: #{forward.13} parent=0 // pred_check
    _
  $region39: #{forward.13} parent=0 // pred_check_branch
    %184 = sbr.rel (0) target = $region41
  $region40: #{forward.13} parent=0 // pred_region
    _
  $region41: #{forward.13} parent=0 // pred_fallthru
    _

// kernel: forward.11
$region0: #{forward.11}
  #allocation0 [shape = 'u32[]', space=smem, size = 0x4, offset = 0x4, fixed_abs, tag = 'smem constant byte address 0x4 - core index']
  #allocation1 [shape = 'u32[144,128]{1,0:T(1,128)}', space=vmem, size = 0x12000, scoped, tag = 'internal scratch']
  #allocation2 [shape = 'f32[16,96]{1,0:T(8,128)}', space=vmem, size = 0x2000, scoped, tag = 'scratch operand']
  %s0 = inlined_call_operand.vmem [shape: bf16[16,32], index: 0, kind: input, shape index: {}]
  %s1 = inlined_call_operand.vmem [shape: bf16[32,96], index: 1, kind: input, shape index: {}]
  %s2 = inlined_call_operand.vmem [shape: f32[1,96], index: 2, kind: input, shape index: {}]
  %s3 = inlined_call_operand.vmem [shape: bf16[16,96], index: 3, kind: output, shape index: {}]
  %s4 = sld [smem:[#allocation0]]
  $region30: #{forward.11} parent=0
    _
  %s6 = ssub.s32 1, %s4
  %s7 = scalar_select 0, %s6, %s4
  // Predicated region
  $region2: #{forward.11} parent=0 // pred_check
    _
  $region3: #{forward.11} parent=0 // pred_check_branch
    %9 = sbr.rel (0) target = $region5
  $region4: #{forward.11} parent=0 // pred_region
    _
  $region5: #{forward.11} parent=0 // pred_fallthru
    _
  // Predicated region
  $region6: #{forward.11} parent=0 // pred_check
    _
  $region7: #{forward.11} parent=0 // pred_check_branch
    %11 = sbr.rel (0) target = $region9
  $region8: #{forward.11} parent=0 // pred_region
    _
  $region9: #{forward.11} parent=0 // pred_fallthru
    _
  // Predicated region
  $region10: #{forward.11} parent=0 // pred_check
    _
  $region11: #{forward.11} parent=0 // pred_check_branch
    %13 = sbr.rel (0) target = $region13
  $region12: #{forward.11} parent=0 // pred_region
    _
  $region13: #{forward.11} parent=0 // pred_fallthru
    _
  %p15 = scmp.eq.s32.totalorder 0, 0
  // Predicated region
  $region14: #{forward.11} parent=0 // pred_check
    %p16 = pneg %p15
  $region15: #{forward.11} parent=0 // pred_check_branch
    %18 = sbr.rel (%p16) target = $region17
  $region16: #{forward.11} parent=0 // pred_region
    %vm19 = vcmask 785408
    %20 = vst.msk [vmem:[#allocation2] sm:$0xff] %vm19, 0.0
    %21 = vst.msk [vmem:[#allocation2 + $0x8] sm:$0xff] %vm19, 0.0
  $region17: #{forward.11} parent=0 // pred_fallthru
    _
  %v22 = vld [vmem:[#allocation2] sm:$0xff]
  %v23 = vld [vmem:[#allocation2 + $0x8] sm:$0xff]
  %v24 = vld [vmem:[%s0] sm:$0xf]
  %v25 = vld [vmem:[%s0 + $0x4] sm:$0xf]
  %v26 = vld [vmem:[%s1] sm:$0xf]
  %v27 = vld [vmem:[%s1 + $0x4] sm:$0xf]
  %v28 = vld [vmem:[%s1 + $0x8] sm:$0xf]
  %v29 = vld [vmem:[%s1 + $0xc] sm:$0xf]
  %v32 = vunpack.c.l.b16 %v24
  %v33 = vunpack.c.l.b16 %v25
  %v34 = vpack.c.b16 %v33, %v32
  %v39 = vunpack.c.l.b16 %v26
  %v40 = vunpack.c.l.b16 %v27
  %v41 = vunpack.c.l.b16 %v28
  %v42 = vunpack.c.l.b16 %v29
  %v43 = vpack.c.b16 %v40, %v39
  %v44 = vpack.c.b16 %v42, %v41
  %vm47 = vcmask 261120
  %v49 = vsel %vm47, %v34, 0
  %51 = vmatprep.subr.bf16.mxu0 0
  %52 = vmatpush1.bf16.msra.mxu0 %v43
  %53 = vmatprep.subr.bf16.mxu0 0
  %54 = vmatpush1.bf16.msra.mxu0 %v44
  %55 = vmatprep.subr.bf16.mxu0 0
  %56 = vmatpush1.bf16.msra.mxu0 0
  %57 = vmatprep.subr.bf16.mxu0 0
  %58 = vmatpush1.bf16.msra.mxu0 0
  %59 = vmatprep.subr.bf16.mxu0 0
  %60 = vmatpush1.bf16.msra.mxu0 0
  %61 = vmatprep.subr.bf16.mxu0 0
  %62 = vmatpush1.bf16.msra.mxu0 0
  %63 = vmatprep.subr.bf16.mxu0 0
  %64 = vmatpush1.bf16.msra.mxu0 0
  %65 = vmatprep.subr.bf16.mxu0 0
  %66 = vmatpush1.bf16.msra.mxu0 0
  %67 = vmatprep.subr.bf16.mxu0 0
  %68 = vmatpush1.bf16.msra.mxu0 0
  %69 = vmatprep.subr.bf16.mxu0 0
  %70 = vmatpush1.bf16.msra.mxu0 0
  %71 = vmatprep.subr.bf16.mxu0 0
  %72 = vmatpush1.bf16.msra.mxu0 0
  %73 = vmatprep.subr.bf16.mxu0 0
  %74 = vmatpush1.bf16.msra.mxu0 0
  %75 = vmatprep.subr.bf16.mxu0 0
  %76 = vmatpush1.bf16.msra.mxu0 0
  %77 = vmatprep.subr.bf16.mxu0 0
  %78 = vmatpush1.bf16.msra.mxu0 0
  %79 = vmatprep.subr.bf16.mxu0 0
  %80 = vmatpush1.bf16.msra.mxu0 0
  %81 = vmatprep.subr.bf16.mxu0 0
  %82 = vmatpush1.bf16.msra.mxu0 0
  %83 = vmatprep.mubr.bf16.mxu0 0
  %84 = vmatmul.mubr.bf16.gmra.mrb[0].mxu0 %v49
  %v85 = vpop.f32.mrb[0].mxu0
  %v86 = vadd.f32 0.0, %v85
  %v87 = vpop.f32.mrb[0].mxu0
  %v88 = vpop.f32.mrb[0].mxu0
  %v89 = vadd.f32 0.0, %v88
  %v90 = vpop.f32.mrb[0].mxu0
  %91 = vdwg.mxu0
  %v92 = vadd.f32 %v22, %v86
  %v93 = vadd.f32 %v23, %v89
  %vm94 = vcmask 785408
  %95 = vst.msk [vmem:[#allocation2] sm:$0xff] %vm94, %v92
  %96 = vst.msk [vmem:[#allocation2 + $0x8] sm:$0xff] %vm94, %v93
  // Predicated region
  $region18: #{forward.11} parent=0 // pred_check
    %p97 = pneg %p15
  $region19: #{forward.11} parent=0 // pred_check_branch
    %99 = sbr.rel (%p97) target = $region21
  $region20: #{forward.11} parent=0 // pred_region
    %v100 = vld [vmem:[#allocation2] sm:$0xff]
    %v101 = vld [vmem:[#allocation2 + $0x8] sm:$0xff]
    %v102 = vld [vmem:[%s2] sm:$0x1]
    %v104 = vlaneseq
    %v105 = vshrl.u32 %v104, 7
    %v106 = vsub.s32 0, %v105
    %v107 = vrot.slane %v102, %v106
    %v109 = vadd.f32 %v100, %v107
    %v110 = vadd.f32 %v101, %v107
    %v111 = vpack.c.bf16 %v110, %v109
    %v113 = vunpack.c.l.b16 %v111
    %v114 = vunpack.c.h.b16 %v111
    %v115 = vpack.c.b16 %v113, %v113
    %v116 = vpack.c.b16 %v114, %v114
    %vm119 = vcmask 781312
    %120 = vst.msk [vmem:[%s3] sm:$0xf] %vm119, %v115
    %121 = vst.msk [vmem:[%s3 + $0x4] sm:$0xf] %vm119, %v116
  $region21: #{forward.11} parent=0 // pred_fallthru
    _
  // Predicated region
  $region22: #{forward.11} parent=0 // pred_check
    _
  $region23: #{forward.11} parent=0 // pred_check_branch
    %123 = sbr.rel (0) target = $region25
  $region24: #{forward.11} parent=0 // pred_region
    _
  $region25: #{forward.11} parent=0 // pred_fallthru
    _
  // Predicated region
  $region26: #{forward.11} parent=0 // pred_check
    _
  $region27: #{forward.11} parent=0 // pred_check_branch
    %125 = sbr.rel (0) target = $region29
  $region28: #{forward.11} parent=0 // pred_region
    _
  $region29: #{forward.11} parent=0 // pred_fallthru
    _

// kernel: forward.21
$region0: #{forward.21}
  #allocation0 [shape = 'u32[]', space=smem, size = 0x4, offset = 0x4, fixed_abs, tag = 'smem constant byte address 0x4 - core index']
  #allocation1 [shape = 'u32[144,128]{1,0:T(1,128)}', space=vmem, size = 0x12000, scoped, tag = 'internal scratch']
  #allocation2 [shape = 'f32[16,64]{1,0:T(8,128)}', space=vmem, size = 0x2000, scoped, tag = 'scratch operand']
  %s0 = inlined_call_operand.vmem [shape: bf16[16,32], index: 0, kind: input, shape index: {}]
  %s1 = inlined_call_operand.vmem [shape: bf16[32,64], index: 1, kind: input, shape index: {}]
  %s2 = inlined_call_operand.vmem [shape: f32[1,64], index: 2, kind: input, shape index: {}]
  %s3 = inlined_call_operand.hbm [shape: f32[16,64], index: 3, kind: output, shape index: {}]
  %s4 = sld [smem:[#allocation0]]
  $region30: #{forward.21} parent=0
    _
  %s6 = ssub.s32 1, %s4
  %s7 = scalar_select 0, %s6, %s4
  $region1: #{forward.21} parent=0
    #allocation3 [shape = 'u8[8192]{0}', space=vmem, size = 0x2000, scoped, tag = 'output window, operand 0, single buffered']
    #allocation4 [shape = 's32[1]{0}', space=sflag, size = 0x4, scoped, tag = 'scoped memory for forward.21']
    %8 = vsyncpa [#allocation4], 0
    // Predicated region
    $region2: #{forward.21} parent=1 // pred_check
      _
    $region3: #{forward.21} parent=1 // pred_check_branch
      %10 = sbr.rel (0) target = $region5
    $region4: #{forward.21} parent=1 // pred_region
      _
    $region5: #{forward.21} parent=1 // pred_fallthru
      _
    // Predicated region
    $region6: #{forward.21} parent=1 // pred_check
      _
    $region7: #{forward.21} parent=1 // pred_check_branch
      %12 = sbr.rel (0) target = $region9
    $region8: #{forward.21} parent=1 // pred_region
      _
    $region9: #{forward.21} parent=1 // pred_fallthru
      _
    // Predicated region
    $region10: #{forward.21} parent=1 // pred_check
      _
    $region11: #{forward.21} parent=1 // pred_check_branch
      %14 = sbr.rel (0) target = $region13
    $region12: #{forward.21} parent=1 // pred_region
      _
    $region13: #{forward.21} parent=1 // pred_fallthru
      _
    %p16 = scmp.eq.s32.totalorder 0, 0
    // Predicated region
    $region14: #{forward.21} parent=1 // pred_check
      %p17 = pneg %p16
    $region15: #{forward.21} parent=1 // pred_check_branch
      %19 = sbr.rel (%p17) target = $region17
    $region16: #{forward.21} parent=1 // pred_region
      %vm20 = vcmask 523264
      %21 = vst.msk [vmem:[#allocation2] sm:$0xff] %vm20, 0.0
      %22 = vst.msk [vmem:[#allocation2 + $0x8] sm:$0xff] %vm20, 0.0
    $region17: #{forward.21} parent=1 // pred_fallthru
      _
    %v23 = vld [vmem:[#allocation2] sm:$0xff]
    %v24 = vld [vmem:[#allocation2 + $0x8] sm:$0xff]
    %v25 = vld [vmem:[%s0] sm:$0xf]
    %v26 = vld [vmem:[%s0 + $0x4] sm:$0xf]
    %v27 = vld [vmem:[%s1] sm:$0xf]
    %v28 = vld [vmem:[%s1 + $0x4] sm:$0xf]
    %v29 = vld [vmem:[%s1 + $0x8] sm:$0xf]
    %v30 = vld [vmem:[%s1 + $0xc] sm:$0xf]
    %v33 = vunpack.c.l.b16 %v25
    %v34 = vunpack.c.l.b16 %v26
    %v35 = vpack.c.b16 %v34, %v33
    %v40 = vunpack.c.l.b16 %v27
    %v41 = vunpack.c.l.b16 %v28
    %v42 = vunpack.c.l.b16 %v29
    %v43 = vunpack.c.l.b16 %v30
    %v44 = vpack.c.b16 %v41, %v40
    %v45 = vpack.c.b16 %v43, %v42
    %vm48 = vcmask 261120
    %v50 = vsel %vm48, %v35, 0
    %52 = vmatprep.subr.bf16.mxu0 0
    %53 = vmatpush1.bf16.msra.mxu0 %v44
    %54 = vmatprep.subr.bf16.mxu0 0
    %55 = vmatpush1.bf16.msra.mxu0 %v45
    %56 = vmatprep.subr.bf16.mxu0 0
    %57 = vmatpush1.bf16.msra.mxu0 0
    %58 = vmatprep.subr.bf16.mxu0 0
    %59 = vmatpush1.bf16.msra.mxu0 0
    %60 = vmatprep.subr.bf16.mxu0 0
    %61 = vmatpush1.bf16.msra.mxu0 0
    %62 = vmatprep.subr.bf16.mxu0 0
    %63 = vmatpush1.bf16.msra.mxu0 0
    %64 = vmatprep.subr.bf16.mxu0 0
    %65 = vmatpush1.bf16.msra.mxu0 0
    %66 = vmatprep.subr.bf16.mxu0 0
    %67 = vmatpush1.bf16.msra.mxu0 0
    %68 = vmatprep.subr.bf16.mxu0 0
    %69 = vmatpush1.bf16.msra.mxu0 0
    %70 = vmatprep.subr.bf16.mxu0 0
    %71 = vmatpush1.bf16.msra.mxu0 0
    %72 = vmatprep.subr.bf16.mxu0 0
    %73 = vmatpush1.bf16.msra.mxu0 0
    %74 = vmatprep.subr.bf16.mxu0 0
    %75 = vmatpush1.bf16.msra.mxu0 0
    %76 = vmatprep.subr.bf16.mxu0 0
    %77 = vmatpush1.bf16.msra.mxu0 0
    %78 = vmatprep.subr.bf16.mxu0 0
    %79 = vmatpush1.bf16.msra.mxu0 0
    %80 = vmatprep.subr.bf16.mxu0 0
    %81 = vmatpush1.bf16.msra.mxu0 0
    %82 = vmatprep.subr.bf16.mxu0 0
    %83 = vmatpush1.bf16.msra.mxu0 0
    %84 = vmatprep.mubr.bf16.mxu0 0
    %85 = vmatmul.mubr.bf16.gmra.mrb[0].mxu0 %v50
    %v86 = vpop.f32.mrb[0].mxu0
    %v87 = vadd.f32 0.0, %v86
    %v88 = vpop.f32.mrb[0].mxu0
    %v89 = vpop.f32.mrb[0].mxu0
    %v90 = vadd.f32 0.0, %v89
    %v91 = vpop.f32.mrb[0].mxu0
    %92 = vdwg.mxu0
    %v93 = vadd.f32 %v23, %v87
    %v94 = vadd.f32 %v24, %v90
    %vm95 = vcmask 523264
    %96 = vst.msk [vmem:[#allocation2] sm:$0xff] %vm95, %v93
    %97 = vst.msk [vmem:[#allocation2 + $0x8] sm:$0xff] %vm95, %v94
    // Predicated region
    $region18: #{forward.21} parent=1 // pred_check
      %p98 = pneg %p16
    $region19: #{forward.21} parent=1 // pred_check_branch
      %100 = sbr.rel (%p98) target = $region21
    $region20: #{forward.21} parent=1 // pred_region
      %v101 = vld [vmem:[#allocation2] sm:$0xff]
      %v102 = vld [vmem:[#allocation2 + $0x8] sm:$0xff]
      %v103 = vld [vmem:[%s2] sm:$0x1]
      %v105 = vlaneseq
      %v106 = vshrl.u32 %v105, 7
      %v107 = vsub.s32 0, %v106
      %v108 = vrot.slane %v103, %v107
      %v110 = vadd.f32 %v101, %v108
      %v111 = vadd.f32 %v102, %v108
      %112 = vst.msk [vmem:[#allocation3] sm:$0xff] %vm95, %v110
      %113 = vst.msk [vmem:[#allocation3 + $0x8] sm:$0xff] %vm95, %v111
    $region21: #{forward.21} parent=1 // pred_fallthru
      _
    // Predicated region
    $region22: #{forward.21} parent=1 // pred_check
      _
    $region23: #{forward.21} parent=1 // pred_check_branch
      %115 = sbr.rel (0) target = $region25
    $region24: #{forward.21} parent=1 // pred_region
      %s117 = ssub.s32 256, 256
      %118 = vsyncadd [#allocation4], %s117
      %s119 = sshll.u32 [#allocation3], 4
      %s120 = int_to_ptr.vmem [resolvable:$true] %s119
      %125 = dma.vmem_to_hbm [thread:$0]  %s120, 256, %s3, [#allocation4], 128, 128, 8
    $region25: #{forward.21} parent=1 // pred_fallthru
      _
    // Predicated region
    $region26: #{forward.21} parent=1 // pred_check
      _
    $region27: #{forward.21} parent=1 // pred_check_branch
      %127 = sbr.rel (0) target = $region29
    $region28: #{forward.21} parent=1 // pred_region
      %128 = dma.done [#allocation4], 256
    $region29: #{forward.21} parent=1 // pred_fallthru
      _
    %129 = vsyncpa [#allocation4], 1

// kernel: forward.15
$region0: #{forward.15}
  #allocation0 [shape = 'u32[]', space=smem, size = 0x4, offset = 0x4, fixed_abs, tag = 'smem constant byte address 0x4 - core index']
  #allocation1 [shape = 'u32[144,128]{1,0:T(1,128)}', space=vmem, size = 0x12000, scoped, tag = 'internal scratch']
  #allocation2 [shape = 'f32[16,32]{1,0:T(8,128)}', space=vmem, size = 0x2000, scoped, tag = 'scratch operand']
  %s0 = inlined_call_operand.vmem [shape: bf16[16,64], index: 0, kind: input, shape index: {}]
  %s1 = inlined_call_operand.vmem [shape: bf16[64,32], index: 1, kind: input, shape index: {}]
  %s2 = inlined_call_operand.vmem [shape: f32[1,32], index: 2, kind: input, shape index: {}]
  %s3 = inlined_call_operand.vmem [shape: bf16[16,32], index: 3, kind: input, shape index: {}]
  %s4 = inlined_call_operand.vmem [shape: f32[1,32], index: 4, kind: input, shape index: {}]
  %s5 = inlined_call_operand.vmem [shape: f32[1,32], index: 5, kind: input, shape index: {}]
  %s6 = inlined_call_operand.vmem [shape: bf16[16,32], index: 6, kind: output, shape index: {}]
  %s7 = sld [smem:[#allocation0]]
  $region42: #{forward.15} parent=0
    _
  %s9 = ssub.s32 1, %s7
  %s10 = scalar_select 0, %s9, %s7
  // Predicated region
  $region2: #{forward.15} parent=0 // pred_check
    _
  $region3: #{forward.15} parent=0 // pred_check_branch
    %12 = sbr.rel (0) target = $region5
  $region4: #{forward.15} parent=0 // pred_region
    _
  $region5: #{forward.15} parent=0 // pred_fallthru
    _
  // Predicated region
  $region6: #{forward.15} parent=0 // pred_check
    _
  $region7: #{forward.15} parent=0 // pred_check_branch
    %14 = sbr.rel (0) target = $region9
  $region8: #{forward.15} parent=0 // pred_region
    _
  $region9: #{forward.15} parent=0 // pred_fallthru
    _
  // Predicated region
  $region10: #{forward.15} parent=0 // pred_check
    _
  $region11: #{forward.15} parent=0 // pred_check_branch
    %16 = sbr.rel (0) target = $region13
  $region12: #{forward.15} parent=0 // pred_region
    _
  $region13: #{forward.15} parent=0 // pred_fallthru
    _
  // Predicated region
  $region14: #{forward.15} parent=0 // pred_check
    _
  $region15: #{forward.15} parent=0 // pred_check_branch
    %18 = sbr.rel (0) target = $region17
  $region16: #{forward.15} parent=0 // pred_region
    _
  $region17: #{forward.15} parent=0 // pred_fallthru
    _
  // Predicated region
  $region18: #{forward.15} parent=0 // pred_check
    _
  $region19: #{forward.15} parent=0 // pred_check_branch
    %20 = sbr.rel (0) target = $region21
  $region20: #{forward.15} parent=0 // pred_region
    _
  $region21: #{forward.15} parent=0 // pred_fallthru
    _
  // Predicated region
  $region22: #{forward.15} parent=0 // pred_check
    _
  $region23: #{forward.15} parent=0 // pred_check_branch
    %22 = sbr.rel (0) target = $region25
  $region24: #{forward.15} parent=0 // pred_region
    _
  $region25: #{forward.15} parent=0 // pred_fallthru
    _
  %p24 = scmp.eq.s32.totalorder 0, 0
  // Predicated region
  $region26: #{forward.15} parent=0 // pred_check
    %p25 = pneg %p24
  $region27: #{forward.15} parent=0 // pred_check_branch
    %27 = sbr.rel (%p25) target = $region29
  $region28: #{forward.15} parent=0 // pred_region
    %vm28 = vcmask 261120
    %29 = vst.msk [vmem:[#allocation2] sm:$0xff] %vm28, 0.0
    %30 = vst.msk [vmem:[#allocation2 + $0x8] sm:$0xff] %vm28, 0.0
  $region29: #{forward.15} parent=0 // pred_fallthru
    _
  %v31 = vld [vmem:[#allocation2] sm:$0xff]
  %v32 = vld [vmem:[#allocation2 + $0x8] sm:$0xff]
  %v33 = vld [vmem:[%s0] sm:$0xf]
  %v34 = vld [vmem:[%s0 + $0x4] sm:$0xf]
  %v35 = vld [vmem:[%s1] sm:$0xf]
  %v36 = vld [vmem:[%s1 + $0x4] sm:$0xf]
  %v37 = vld [vmem:[%s1 + $0x8] sm:$0xf]
  %v38 = vld [vmem:[%s1 + $0xc] sm:$0xf]
  %v39 = vld [vmem:[%s1 + $0x10] sm:$0xf]
  %v40 = vld [vmem:[%s1 + $0x14] sm:$0xf]
  %v41 = vld [vmem:[%s1 + $0x18] sm:$0xf]
  %v42 = vld [vmem:[%s1 + $0x1c] sm:$0xf]
  %v45 = vunpack.c.l.b16 %v33
  %v46 = vunpack.c.l.b16 %v34
  %v47 = vpack.c.b16 %v46, %v45
  %v56 = vunpack.c.l.b16 %v35
  %v57 = vunpack.c.l.b16 %v36
  %v58 = vunpack.c.l.b16 %v37
  %v59 = vunpack.c.l.b16 %v38
  %v60 = vunpack.c.l.b16 %v39
  %v61 = vunpack.c.l.b16 %v40
  %v62 = vunpack.c.l.b16 %v41
  %v63 = vunpack.c.l.b16 %v42
  %v64 = vpack.c.b16 %v57, %v56
  %v65 = vpack.c.b16 %v59, %v58
  %v66 = vpack.c.b16 %v61, %v60
  %v67 = vpack.c.b16 %v63, %v62
  %vm72 = vcmask 523264
  %v74 = vsel %vm72, %v47, 0
  %76 = vmatprep.subr.bf16.mxu0 0
  %77 = vmatpush1.bf16.msra.mxu0 %v64
  %78 = vmatprep.subr.bf16.mxu0 0
  %79 = vmatpush1.bf16.msra.mxu0 %v65
  %80 = vmatprep.subr.bf16.mxu0 0
  %81 = vmatpush1.bf16.msra.mxu0 %v66
  %82 = vmatprep.subr.bf16.mxu0 0
  %83 = vmatpush1.bf16.msra.mxu0 %v67
  %84 = vmatprep.subr.bf16.mxu0 0
  %85 = vmatpush1.bf16.msra.mxu0 0
  %86 = vmatprep.subr.bf16.mxu0 0
  %87 = vmatpush1.bf16.msra.mxu0 0
  %88 = vmatprep.subr.bf16.mxu0 0
  %89 = vmatpush1.bf16.msra.mxu0 0
  %90 = vmatprep.subr.bf16.mxu0 0
  %91 = vmatpush1.bf16.msra.mxu0 0
  %92 = vmatprep.subr.bf16.mxu0 0
  %93 = vmatpush1.bf16.msra.mxu0 0
  %94 = vmatprep.subr.bf16.mxu0 0
  %95 = vmatpush1.bf16.msra.mxu0 0
  %96 = vmatprep.subr.bf16.mxu0 0
  %97 = vmatpush1.bf16.msra.mxu0 0
  %98 = vmatprep.subr.bf16.mxu0 0
  %99 = vmatpush1.bf16.msra.mxu0 0
  %100 = vmatprep.subr.bf16.mxu0 0
  %101 = vmatpush1.bf16.msra.mxu0 0
  %102 = vmatprep.subr.bf16.mxu0 0
  %103 = vmatpush1.bf16.msra.mxu0 0
  %104 = vmatprep.subr.bf16.mxu0 0
  %105 = vmatpush1.bf16.msra.mxu0 0
  %106 = vmatprep.subr.bf16.mxu0 0
  %107 = vmatpush1.bf16.msra.mxu0 0
  %108 = vmatprep.mubr.bf16.mxu0 0
  %109 = vmatmul.mubr.bf16.gmra.mrb[0].mxu0 %v74
  %v110 = vpop.f32.mrb[0].mxu0
  %v111 = vadd.f32 0.0, %v110
  %v112 = vpop.f32.mrb[0].mxu0
  %v113 = vpop.f32.mrb[0].mxu0
  %v114 = vadd.f32 0.0, %v113
  %v115 = vpop.f32.mrb[0].mxu0
  %116 = vdwg.mxu0
  %v117 = vadd.f32 %v31, %v111
  %v118 = vadd.f32 %v32, %v114
  %vm119 = vcmask 261120
  %120 = vst.msk [vmem:[#allocation2] sm:$0xff] %vm119, %v117
  %121 = vst.msk [vmem:[#allocation2 + $0x8] sm:$0xff] %vm119, %v118
  // Predicated region
  $region30: #{forward.15} parent=0 // pred_check
    %p122 = pneg %p24
  $region31: #{forward.15} parent=0 // pred_check_branch
    %124 = sbr.rel (%p122) target = $region33
  $region32: #{forward.15} parent=0 // pred_region
    %v125 = vld [vmem:[#allocation2] sm:$0xff]
    %v126 = vld [vmem:[#allocation2 + $0x8] sm:$0xff]
    %v127 = vld [vmem:[%s2] sm:$0x1]
    %v129 = vlaneseq
    %v130 = vshrl.u32 %v129, 7
    %v131 = vsub.s32 0, %v130
    %v132 = vrot.slane %v127, %v131
    %v134 = vadd.f32 %v125, %v132
    %v135 = vadd.f32 %v126, %v132
    %v136 = vld [vmem:[%s3] sm:$0xf]
    %v137 = vld [vmem:[%s3 + $0x4] sm:$0xf]
    %v138 = vunpack.c.l.bf16 %v136
    %v139 = vunpack.c.l.bf16 %v137
    %v140 = vadd.f32 %v134, %v138
    %v141 = vadd.f32 %v135, %v139
    %v142 = vsel %vm119, %v140, 0.0
    %143 = vadd.xlane.f32.xlu0 %v142
    %v144 = vpop.xlane.xlu0 %143
    %v145 = vsel %vm119, %v141, 0.0
    %146 = vadd.xlane.f32.xlu0 %v145
    %v147 = vpop.xlane.xlu0 %146
    %v148 = vrcp.pop 32.0
    %v149 = vmul.f32 %v144, %v148
    %v150 = vmul.f32 %v147, %v148
    %v151 = vsub.f32 %v140, %v149
    %v152 = vsub.f32 %v141, %v150
    %v153 = vmul.f32 %v151, %v151
    %v154 = vmul.f32 %v152, %v152
    %v155 = vsel %vm119, %v153, 0.0
    %156 = vadd.xlane.f32.xlu0 %v155
    %v157 = vpop.xlane.xlu0 %156
    %v158 = vsel %vm119, %v154, 0.0
    %159 = vadd.xlane.f32.xlu0 %v158
    %v160 = vpop.xlane.xlu0 %159
    %v161 = vmul.f32 %v157, %v148
    %v162 = vmul.f32 %v160, %v148
    %v163 = vadd.f32 %v161, 1e-05
    %v164 = vadd.f32 %v162, 1e-05
    %v165 = vrsqrt.pop %v163
    %v166 = vrsqrt.pop %v164
    %v167 = vmul.f32 %v151, %v165
    %v168 = vmul.f32 %v152, %v166
    %v169 = vld [vmem:[%s4] sm:$0x1]
    %v171 = vlaneseq
    %v172 = vshrl.u32 %v171, 7
    %v173 = vsub.s32 0, %v172
    %v174 = vrot.slane %v169, %v173
    %v176 = vmul.f32 %v167, %v174
    %v177 = vmul.f32 %v168, %v174
    %v178 = vld [vmem:[%s5] sm:$0x1]
    %v180 = vlaneseq
    %v181 = vshrl.u32 %v180, 7
    %v182 = vsub.s32 0, %v181
    %v183 = vrot.slane %v178, %v182
    %v185 = vadd.f32 %v176, %v183
    %v186 = vadd.f32 %v177, %v183
    %v187 = vpack.c.bf16 %v186, %v185
    %v189 = vunpack.c.l.b16 %v187
    %v190 = vunpack.c.h.b16 %v187
    %v191 = vpack.c.b16 %v189, %v189
    %v192 = vpack.c.b16 %v190, %v190
    %vm195 = vcmask 257024
    %196 = vst.msk [vmem:[%s6] sm:$0xf] %vm195, %v191
    %197 = vst.msk [vmem:[%s6 + $0x4] sm:$0xf] %vm195, %v192
  $region33: #{forward.15} parent=0 // pred_fallthru
    _
  // Predicated region
  $region34: #{forward.15} parent=0 // pred_check
    _
  $region35: #{forward.15} parent=0 // pred_check_branch
    %199 = sbr.rel (0) target = $region37
  $region36: #{forward.15} parent=0 // pred_region
    _
  $region37: #{forward.15} parent=0 // pred_fallthru
    _
  // Predicated region
  $region38: #{forward.15} parent=0 // pred_check
    _
  $region39: #{forward.15} parent=0 // pred_check_branch
    %201 = sbr.rel (0) target = $region41
  $region40: #{forward.15} parent=0 // pred_region
    _
  $region41: #{forward.15} parent=0 // pred_fallthru
    _

</llo_original>
